<compile_context>
chip_gen: v7x
topology: tpu7x:2x2x1
jax: 0.10.0
libtpu: 0.0.40
codegen_flags: <defaults>
</compile_context>

<pallas_src>
import math
import functools

import jax
import jax.numpy as jnp
from jax.experimental import pallas as pl
from jax.experimental.pallas import tpu as pltpu


def _self_attn_kernel(x_ref, w_ref, o_ref, *, head_num, head_dim, block_b,
                      mxu_dtype):
    """One grid step = `block_b` batch elements.

    x_ref : (block_b, S, D_in)  VMEM
    w_ref : (D_in, 3*H*Dh)      VMEM (fused Wq|Wk|Wv, pre-transposed,
                                      Q columns pre-scaled by 1/sqrt(Dh))
    o_ref : (block_b, S, H*Dh)  VMEM
    """
    S = x_ref.shape[1]
    d_in = x_ref.shape[2]
    mhd = head_num * head_dim

    x = x_ref[...].reshape(block_b * S, d_in)
    w = w_ref[...]
    if mxu_dtype is not None:
        x = x.astype(mxu_dtype)

    # Single fused QKV projection on the MXU (f32 accumulation).
    qkv = jnp.dot(x, w, preferred_element_type=jnp.float32)        # (Bb*S, 3*mhd)
    qkv = qkv.reshape(block_b, S, 3 * mhd)

    out_heads = []
    for h in range(head_num):                    # head_num is small & static
        q = qkv[:, :, h * head_dim:(h + 1) * head_dim]             # (Bb, S, Dh)
        k = qkv[:, :, mhd + h * head_dim:mhd + (h + 1) * head_dim]
        v = qkv[:, :, 2 * mhd + h * head_dim:2 * mhd + (h + 1) * head_dim]
        if mxu_dtype is not None:
            q = q.astype(mxu_dtype)
            k = k.astype(mxu_dtype)
            v = v.astype(mxu_dtype)

        # Scores already carry the 1/sqrt(Dh) scale (folded into Wq on host).
        s = jnp.einsum("bqd,bkd->bqk", q, k,
                       preferred_element_type=jnp.float32)          # (Bb, S, S)

        # Numerically stable softmax over the key axis (f32 VPU/EUP math).
        m = jnp.max(s, axis=-1, keepdims=True)
        e = jnp.exp(s - m)
        denom = jnp.sum(e, axis=-1, keepdims=True)
        p = e * pl.reciprocal(denom, approx=True)

        if mxu_dtype is not None:
            p = p.astype(mxu_dtype)
        out_heads.append(
            jnp.einsum("bqk,bkd->bqd", p, v,
                       preferred_element_type=jnp.float32))         # (Bb, S, Dh)

    # One lane-dense store of the full (Bb, S, H*Dh) block.
    out = jnp.concatenate(out_heads, axis=-1)
    o_ref[...] = out.astype(o_ref.dtype)
    # TODO(synk): optional attention mask (masked_fill) and the 4-D input mode
    # of the PyTorch module are not wired in; the 3-D, mask=None path is
    # reproduced exactly.


def _pick_block_b(B, S):
    """Largest divisor of B with block_b*S MXU-friendly (~256 rows) but VMEM-sane."""
    target_rows = 256          # fills the MXU M dimension on v6e/v7x (>=128 for v5e)
    max_rows = 2048            # keep per-block activations comfortably in VMEM
    block_b = 1
    for d in range(1, B + 1):
        if B % d != 0 or d * S > max_rows:
            continue
        block_b = d
        if d * S >= target_rows:
            break
    return block_b


def self_attn(x, wq, wk, wv, *, head_num, head_dim, block_b=None,
              mxu_dtype=None):
    """x: (B, S, D_in); wq/wk/wv: (H*Dh, D_in) PyTorch-style (x @ W.T, no bias).

    Returns (B, S, H*Dh) with heads concatenated on the last axis, matching the
    PyTorch 3-D forward path.  `mxu_dtype` optionally casts matmul inputs
    (e.g. jnp.bfloat16 on v6e/v7x); accumulation and softmax stay in f32.
    """
    B, S, D_in = x.shape
    mhd = head_num * head_dim
    assert wq.shape == (mhd, D_in)
    assert wk.shape == (mhd, D_in)
    assert wv.shape == (mhd, D_in)

    # Host-side (one-time): fuse Q/K/V, fold the 1/sqrt(Dh) scale into Q,
    # and pre-transpose so the kernel contracts x's last dim directly.
    inv_norm = 1.0 / math.sqrt(float(head_dim))
    w_qkv = jnp.concatenate([wq * inv_norm, wk, wv], axis=0).T      # (D_in, 3*mhd)
    w_qkv = w_qkv.astype(jnp.float32 if mxu_dtype is None else mxu_dtype)

    if block_b is None:
        block_b = _pick_block_b(B, S)
    assert B % block_b == 0, "block_b must divide the batch size"
    grid = (B // block_b,)

    kernel = functools.partial(_self_attn_kernel, head_num=head_num,
                               head_dim=head_dim, block_b=block_b,
                               mxu_dtype=mxu_dtype)

    return pl.pallas_call(
        kernel,
        out_shape=jax.ShapeDtypeStruct((B, S, mhd), jnp.float32),
        grid_spec=pltpu.PrefetchScalarGridSpec(
            num_scalar_prefetch=0,
            grid=grid,
            in_specs=[
                pl.BlockSpec((block_b, S, D_in), lambda b: (b, 0, 0)),
                # Constant-index fused weight block, shared by all grid steps.
                pl.BlockSpec((D_in, 3 * mhd), lambda b: (0, 0)),
            ],
            out_specs=pl.BlockSpec((block_b, S, mhd), lambda b: (b, 0, 0)),
        ),
        compiler_params=pltpu.CompilerParams(
            dimension_semantics=("parallel",)),
    )(x, w_qkv)


def _xavier_uniform(key, shape):
    # nn.init.xavier_uniform_ for nn.Linear weight (fan_out, fan_in)
    fan_out, fan_in = shape
    bound = math.sqrt(6.0 / (fan_in + fan_out))
    return jax.random.uniform(key, shape, jnp.float32, -bound, bound)


def _reference(x, wq, wk, wv, head_num, head_dim):
    """Pure-JAX mirror of the PyTorch 3-mode forward for verification."""
    B, S, _ = x.shape
    mhd = head_num * head_dim
    q = (x @ wq.T).reshape(B, S, head_num, head_dim).transpose(0, 2, 1, 3)
    k = (x @ wk.T).reshape(B, S, head_num, head_dim).transpose(0, 2, 1, 3)
    v = (x @ wv.T).reshape(B, S, head_num, head_dim).transpose(0, 2, 1, 3)
    attn = jnp.einsum("bhqd,bhkd->bhqk", q, k) / jnp.sqrt(jnp.float32(head_dim))
    attn = jax.nn.softmax(attn, axis=-1)
    out = jnp.einsum("bhqk,bhkd->bhqd", attn, v)
    return out.transpose(0, 2, 1, 3).reshape(B, S, mhd)


if __name__ == "__main__":
    # Small shapes consistent with the module: batch=2, seq=8, input_dim=32,
    # head_num=4, head_dim=16 -> multihead_dim=64.
    B, S, D_in = 2, 8, 32
    head_num, head_dim = 4, 16
    mhd = head_num * head_dim

    key = jax.random.PRNGKey(0)
    kx, kq, kk, kv = jax.random.split(key, 4)

    x = jax.random.normal(kx, (B, S, D_in), dtype=jnp.float32)
    wq = _xavier_uniform(kq, (mhd, D_in))
    wk = _xavier_uniform(kk, (mhd, D_in))
    wv = _xavier_uniform(kv, (mhd, D_in))

    out = self_attn(x, wq, wk, wv, head_num=head_num, head_dim=head_dim)
    out = jax.block_until_ready(out)

    ref = _reference(x, wq, wk, wv, head_num, head_dim)
    assert out.shape == (B, S, mhd)
    # Slightly looser tolerance: EUP approximate reciprocal in the softmax.
    assert jnp.allclose(out, ref, atol=2e-3, rtol=2e-3), "mismatch vs reference"

    print("KERNEL_OK")
</pallas_src>

<mosaic_0001>
module attributes {stable_mosaic.version = 11 : i64} {
  func.func @_self_attn_kernel(%arg0: i32, %arg1: memref<2x8x32xf32, #tpu.memory_space<vmem>>, %arg2: memref<32x192xf32, #tpu.memory_space<vmem>>, %arg3: memref<2x8x64xf32, #tpu.memory_space<vmem>>) attributes {dimension_semantics = [#tpu.dimension_semantics<parallel>], iteration_bounds = array<i64: 1>, scalar_prefetch = 0 : i64, scratch_operands = 0 : i64, tpu.core_type = #tpu.core_type<tc>, window_params = [{transform_indices = @transform_0, window_bounds = array<i64: 2, 8, 32>}, {pipeline_mode = #tpu.pipeline_mode<synchronous>, transform_indices = @transform_1, window_bounds = array<i64: 32, 192>}, {transform_indices = @transform_2, window_bounds = array<i64: 2, 8, 64>}]} {
    %c0 = arith.constant 0 : index
    %c0_0 = arith.constant 0 : index
    %c0_1 = arith.constant 0 : index
    %0 = vector.load %arg1[%c0, %c0_0, %c0_1] : memref<2x8x32xf32, #tpu.memory_space<vmem>>, vector<2x8x32xf32>
    %1 = vector.shape_cast %0 : vector<2x8x32xf32> to vector<16x32xf32>
    %c0_2 = arith.constant 0 : index
    %c0_3 = arith.constant 0 : index
    %2 = vector.load %arg2[%c0_2, %c0_3] : memref<32x192xf32, #tpu.memory_space<vmem>>, vector<32x192xf32>
    %cst = arith.constant dense<0.000000e+00> : vector<16x192xf32>
    %3 = tpu.matmul %1, %2, %cst {dimension_numbers = #tpu.dot_dimension_numbers<[1], [0], [0], [1], [0, 0, 1, 1], [], []>} : vector<16x32xf32>, vector<32x192xf32>, vector<16x192xf32> -> vector<16x192xf32>
    %4 = vector.shape_cast %3 : vector<16x192xf32> to vector<2x8x192xf32>
    %5 = vector.extract_strided_slice %4 {offsets = [0, 0, 0], sizes = [2, 8, 16], strides = [1, 1, 1]} : vector<2x8x192xf32> to vector<2x8x16xf32>
    %6 = vector.extract_strided_slice %4 {offsets = [0, 0, 64], sizes = [2, 8, 16], strides = [1, 1, 1]} : vector<2x8x192xf32> to vector<2x8x16xf32>
    %7 = vector.extract_strided_slice %4 {offsets = [0, 0, 128], sizes = [2, 8, 16], strides = [1, 1, 1]} : vector<2x8x192xf32> to vector<2x8x16xf32>
    "tpu.trace_start"() <{level = 10 : i32, message = "bqd,bkd->bqk"}> : () -> ()
    %cst_4 = arith.constant dense<0.000000e+00> : vector<2x8x8xf32>
    %8 = tpu.matmul %5, %6, %cst_4 {dimension_numbers = #tpu.dot_dimension_numbers<[2], [2], [1], [1], [0, 0, 0, 1, 1, 1], [0], [0]>} : vector<2x8x16xf32>, vector<2x8x16xf32>, vector<2x8x8xf32> -> vector<2x8x8xf32>
    "tpu.trace_stop"() : () -> ()
    %cst_5 = arith.constant dense<0xFF800000> : vector<2x8xf32>
    %9 = vector.multi_reduction <maximumf>, %8, %cst_5 [2] : vector<2x8x8xf32> to vector<2x8xf32>
    %10 = vector.shape_cast %9 : vector<2x8xf32> to vector<2x8x1xf32>
    %11 = vector.broadcast %10 : vector<2x8x1xf32> to vector<2x8x8xf32>
    %12 = arith.subf %8, %11 : vector<2x8x8xf32>
    %13 = math.exp %12 : vector<2x8x8xf32>
    %cst_6 = arith.constant dense<0.000000e+00> : vector<2x8xf32>
    %14 = vector.multi_reduction <add>, %13, %cst_6 [2] : vector<2x8x8xf32> to vector<2x8xf32>
    %15 = vector.shape_cast %14 : vector<2x8xf32> to vector<2x8x1xf32>
    %16 = tpu.reciprocal %15 {approx = true} : vector<2x8x1xf32> -> vector<2x8x1xf32>
    %17 = vector.broadcast %16 : vector<2x8x1xf32> to vector<2x8x8xf32>
    %18 = arith.mulf %13, %17 : vector<2x8x8xf32>
    "tpu.trace_start"() <{level = 10 : i32, message = "bqk,bkd->bqd"}> : () -> ()
    %cst_7 = arith.constant dense<0.000000e+00> : vector<2x8x16xf32>
    %19 = tpu.matmul %18, %7, %cst_7 {dimension_numbers = #tpu.dot_dimension_numbers<[2], [1], [1], [2], [0, 0, 0, 1, 1, 2], [0], [0]>} : vector<2x8x8xf32>, vector<2x8x16xf32>, vector<2x8x16xf32> -> vector<2x8x16xf32>
    "tpu.trace_stop"() : () -> ()
    %20 = vector.extract_strided_slice %4 {offsets = [0, 0, 16], sizes = [2, 8, 16], strides = [1, 1, 1]} : vector<2x8x192xf32> to vector<2x8x16xf32>
    %21 = vector.extract_strided_slice %4 {offsets = [0, 0, 80], sizes = [2, 8, 16], strides = [1, 1, 1]} : vector<2x8x192xf32> to vector<2x8x16xf32>
    %22 = vector.extract_strided_slice %4 {offsets = [0, 0, 144], sizes = [2, 8, 16], strides = [1, 1, 1]} : vector<2x8x192xf32> to vector<2x8x16xf32>
    "tpu.trace_start"() <{level = 10 : i32, message = "bqd,bkd->bqk"}> : () -> ()
    %cst_8 = arith.constant dense<0.000000e+00> : vector<2x8x8xf32>
    %23 = tpu.matmul %20, %21, %cst_8 {dimension_numbers = #tpu.dot_dimension_numbers<[2], [2], [1], [1], [0, 0, 0, 1, 1, 1], [0], [0]>} : vector<2x8x16xf32>, vector<2x8x16xf32>, vector<2x8x8xf32> -> vector<2x8x8xf32>
    "tpu.trace_stop"() : () -> ()
    %cst_9 = arith.constant dense<0xFF800000> : vector<2x8xf32>
    %24 = vector.multi_reduction <maximumf>, %23, %cst_9 [2] : vector<2x8x8xf32> to vector<2x8xf32>
    %25 = vector.shape_cast %24 : vector<2x8xf32> to vector<2x8x1xf32>
    %26 = vector.broadcast %25 : vector<2x8x1xf32> to vector<2x8x8xf32>
    %27 = arith.subf %23, %26 : vector<2x8x8xf32>
    %28 = math.exp %27 : vector<2x8x8xf32>
    %cst_10 = arith.constant dense<0.000000e+00> : vector<2x8xf32>
    %29 = vector.multi_reduction <add>, %28, %cst_10 [2] : vector<2x8x8xf32> to vector<2x8xf32>
    %30 = vector.shape_cast %29 : vector<2x8xf32> to vector<2x8x1xf32>
    %31 = tpu.reciprocal %30 {approx = true} : vector<2x8x1xf32> -> vector<2x8x1xf32>
    %32 = vector.broadcast %31 : vector<2x8x1xf32> to vector<2x8x8xf32>
    %33 = arith.mulf %28, %32 : vector<2x8x8xf32>
    "tpu.trace_start"() <{level = 10 : i32, message = "bqk,bkd->bqd"}> : () -> ()
    %cst_11 = arith.constant dense<0.000000e+00> : vector<2x8x16xf32>
    %34 = tpu.matmul %33, %22, %cst_11 {dimension_numbers = #tpu.dot_dimension_numbers<[2], [1], [1], [2], [0, 0, 0, 1, 1, 2], [0], [0]>} : vector<2x8x8xf32>, vector<2x8x16xf32>, vector<2x8x16xf32> -> vector<2x8x16xf32>
    "tpu.trace_stop"() : () -> ()
    %35 = vector.extract_strided_slice %4 {offsets = [0, 0, 32], sizes = [2, 8, 16], strides = [1, 1, 1]} : vector<2x8x192xf32> to vector<2x8x16xf32>
    %36 = vector.extract_strided_slice %4 {offsets = [0, 0, 96], sizes = [2, 8, 16], strides = [1, 1, 1]} : vector<2x8x192xf32> to vector<2x8x16xf32>
    %37 = vector.extract_strided_slice %4 {offsets = [0, 0, 160], sizes = [2, 8, 16], strides = [1, 1, 1]} : vector<2x8x192xf32> to vector<2x8x16xf32>
    "tpu.trace_start"() <{level = 10 : i32, message = "bqd,bkd->bqk"}> : () -> ()
    %cst_12 = arith.constant dense<0.000000e+00> : vector<2x8x8xf32>
    %38 = tpu.matmul %35, %36, %cst_12 {dimension_numbers = #tpu.dot_dimension_numbers<[2], [2], [1], [1], [0, 0, 0, 1, 1, 1], [0], [0]>} : vector<2x8x16xf32>, vector<2x8x16xf32>, vector<2x8x8xf32> -> vector<2x8x8xf32>
    "tpu.trace_stop"() : () -> ()
    %cst_13 = arith.constant dense<0xFF800000> : vector<2x8xf32>
    %39 = vector.multi_reduction <maximumf>, %38, %cst_13 [2] : vector<2x8x8xf32> to vector<2x8xf32>
    %40 = vector.shape_cast %39 : vector<2x8xf32> to vector<2x8x1xf32>
    %41 = vector.broadcast %40 : vector<2x8x1xf32> to vector<2x8x8xf32>
    %42 = arith.subf %38, %41 : vector<2x8x8xf32>
    %43 = math.exp %42 : vector<2x8x8xf32>
    %cst_14 = arith.constant dense<0.000000e+00> : vector<2x8xf32>
    %44 = vector.multi_reduction <add>, %43, %cst_14 [2] : vector<2x8x8xf32> to vector<2x8xf32>
    %45 = vector.shape_cast %44 : vector<2x8xf32> to vector<2x8x1xf32>
    %46 = tpu.reciprocal %45 {approx = true} : vector<2x8x1xf32> -> vector<2x8x1xf32>
    %47 = vector.broadcast %46 : vector<2x8x1xf32> to vector<2x8x8xf32>
    %48 = arith.mulf %43, %47 : vector<2x8x8xf32>
    "tpu.trace_start"() <{level = 10 : i32, message = "bqk,bkd->bqd"}> : () -> ()
    %cst_15 = arith.constant dense<0.000000e+00> : vector<2x8x16xf32>
    %49 = tpu.matmul %48, %37, %cst_15 {dimension_numbers = #tpu.dot_dimension_numbers<[2], [1], [1], [2], [0, 0, 0, 1, 1, 2], [0], [0]>} : vector<2x8x8xf32>, vector<2x8x16xf32>, vector<2x8x16xf32> -> vector<2x8x16xf32>
    "tpu.trace_stop"() : () -> ()
    %50 = vector.extract_strided_slice %4 {offsets = [0, 0, 48], sizes = [2, 8, 16], strides = [1, 1, 1]} : vector<2x8x192xf32> to vector<2x8x16xf32>
    %51 = vector.extract_strided_slice %4 {offsets = [0, 0, 112], sizes = [2, 8, 16], strides = [1, 1, 1]} : vector<2x8x192xf32> to vector<2x8x16xf32>
    %52 = vector.extract_strided_slice %4 {offsets = [0, 0, 176], sizes = [2, 8, 16], strides = [1, 1, 1]} : vector<2x8x192xf32> to vector<2x8x16xf32>
    "tpu.trace_start"() <{level = 10 : i32, message = "bqd,bkd->bqk"}> : () -> ()
    %cst_16 = arith.constant dense<0.000000e+00> : vector<2x8x8xf32>
    %53 = tpu.matmul %50, %51, %cst_16 {dimension_numbers = #tpu.dot_dimension_numbers<[2], [2], [1], [1], [0, 0, 0, 1, 1, 1], [0], [0]>} : vector<2x8x16xf32>, vector<2x8x16xf32>, vector<2x8x8xf32> -> vector<2x8x8xf32>
    "tpu.trace_stop"() : () -> ()
    %cst_17 = arith.constant dense<0xFF800000> : vector<2x8xf32>
    %54 = vector.multi_reduction <maximumf>, %53, %cst_17 [2] : vector<2x8x8xf32> to vector<2x8xf32>
    %55 = vector.shape_cast %54 : vector<2x8xf32> to vector<2x8x1xf32>
    %56 = vector.broadcast %55 : vector<2x8x1xf32> to vector<2x8x8xf32>
    %57 = arith.subf %53, %56 : vector<2x8x8xf32>
    %58 = math.exp %57 : vector<2x8x8xf32>
    %cst_18 = arith.constant dense<0.000000e+00> : vector<2x8xf32>
    %59 = vector.multi_reduction <add>, %58, %cst_18 [2] : vector<2x8x8xf32> to vector<2x8xf32>
    %60 = vector.shape_cast %59 : vector<2x8xf32> to vector<2x8x1xf32>
    %61 = tpu.reciprocal %60 {approx = true} : vector<2x8x1xf32> -> vector<2x8x1xf32>
    %62 = vector.broadcast %61 : vector<2x8x1xf32> to vector<2x8x8xf32>
    %63 = arith.mulf %58, %62 : vector<2x8x8xf32>
    "tpu.trace_start"() <{level = 10 : i32, message = "bqk,bkd->bqd"}> : () -> ()
    %cst_19 = arith.constant dense<0.000000e+00> : vector<2x8x16xf32>
    %64 = tpu.matmul %63, %52, %cst_19 {dimension_numbers = #tpu.dot_dimension_numbers<[2], [1], [1], [2], [0, 0, 0, 1, 1, 2], [0], [0]>} : vector<2x8x8xf32>, vector<2x8x16xf32>, vector<2x8x16xf32> -> vector<2x8x16xf32>
    "tpu.trace_stop"() : () -> ()
    %65 = tpu.concatenate %19, %34, %49, %64 in 2 : vector<2x8x16xf32>, vector<2x8x16xf32>, vector<2x8x16xf32>, vector<2x8x16xf32> -> vector<2x8x64xf32>
    %c0_20 = arith.constant 0 : index
    %c0_21 = arith.constant 0 : index
    %c0_22 = arith.constant 0 : index
    %66 = vector.load %arg3[%c0_20, %c0_21, %c0_22] : memref<2x8x64xf32, #tpu.memory_space<vmem>>, vector<2x8x64xf32>
    tpu.vector_store %arg3[%c0_20, %c0_21, %c0_22], %65 {strides = array<i32>} : memref<2x8x64xf32, #tpu.memory_space<vmem>>, vector<2x8x64xf32>,
    return
  }
  func.func @transform_0(%arg0: i32) -> (i32, i32, i32) {
    %c0_i32 = arith.constant 0 : i32
    %c0_i32_0 = arith.constant 0 : i32
    %c0_i32_1 = arith.constant 0 : i32
    return %arg0, %c0_i32, %c0_i32_0 : i32, i32, i32
  }
  func.func @transform_1(%arg0: i32) -> (i32, i32) {
    %c0_i32 = arith.constant 0 : i32
    %c0_i32_0 = arith.constant 0 : i32
    %c0_i32_1 = arith.constant 0 : i32
    return %c0_i32, %c0_i32_0 : i32, i32
  }
  func.func @transform_2(%arg0: i32) -> (i32, i32, i32) {
    %c0_i32 = arith.constant 0 : i32
    %c0_i32_0 = arith.constant 0 : i32
    %c0_i32_1 = arith.constant 0 : i32
    return %arg0, %c0_i32, %c0_i32_0 : i32, i32, i32
  }
}

</mosaic_0001>

<llo_original>
// kernel: tpu_custom_call.1
$region0: #{tpu_custom_call.1}
  #allocation0 [shape = 'u32[]', space=smem, size = 0x4, offset = 0x4, fixed_abs, tag = 'smem constant byte address 0x4 - core index']
  #allocation1 [shape = 'u32[144,128]{1,0:T(1,128)}', space=vmem, size = 0x12000, scoped, tag = 'internal scratch']
  %s0 = inlined_call_operand.hbm [shape: f32[2,8,32], index: 0, kind: input, shape index: {}]
  %s1 = inlined_call_operand.hbm [shape: f32[32,192], index: 1, kind: input, shape index: {}]
  %s2 = inlined_call_operand.hbm [shape: f32[2,8,64], index: 2, kind: output, shape index: {}]
  %s3 = sld [smem:[#allocation0]]
  $region26: #{tpu_custom_call.1} parent=0
    _
  %s5 = ssub.s32 1, %s3
  %s6 = scalar_select 0, %s5, %s3
  $region1: #{tpu_custom_call.1} parent=0
    #allocation2 [shape = 'u8[8192]{0}', space=vmem, size = 0x2000, scoped, tag = 'input window, operand 0, single buffered']
    #allocation3 [shape = 's32[1]{0}', space=sflag, size = 0x4, scoped, tag = 'scoped memory for tpu_custom_call.1']
    #allocation4 [shape = 's32[1]{0}', space=sflag, size = 0x4, scoped, tag = 'scoped memory for tpu_custom_call.1']
    #allocation5 [shape = 'u8[32768]{0}', space=vmem, size = 0x8000, scoped, tag = 'input window, operand 1, single buffered']
    #allocation6 [shape = 's32[1]{0}', space=sflag, size = 0x4, scoped, tag = 'scoped memory for tpu_custom_call.1']
    #allocation7 [shape = 'u8[8192]{0}', space=vmem, size = 0x2000, scoped, tag = 'output window, operand 0, single buffered']
    %7 = vsyncpa [#allocation3], 0
    %8 = vsyncpa [#allocation6], 0
    %9 = vsyncpa [#allocation4], 0
    // Predicated region
    $region2: #{tpu_custom_call.1} parent=1 // pred_check
      _
    $region3: #{tpu_custom_call.1} parent=1 // pred_check_branch
      %11 = sbr.rel (0) target = $region5
    $region4: #{tpu_custom_call.1} parent=1 // pred_region
      %s13 = ssub.s32 256, 256
      %14 = vsyncadd [#allocation3], %s13
      %s15 = sshll.u32 [#allocation2], 4
      %s16 = int_to_ptr.vmem [resolvable:$true] %s15
      %21 = dma.hbm_to_vmem [thread:$0]  %s0, 256, %s16, [#allocation3], 128, 128, 8
    $region5: #{tpu_custom_call.1} parent=1 // pred_fallthru
      _
    // Predicated region
    $region6: #{tpu_custom_call.1} parent=1 // pred_check
      _
    $region7: #{tpu_custom_call.1} parent=1 // pred_check_branch
      %23 = sbr.rel (0) target = $region9
    $region8: #{tpu_custom_call.1} parent=1 // pred_region
      %s25 = ssub.s32 1024, 1024
      %26 = vsyncadd [#allocation6], %s25
      %s27 = sshll.u32 [#allocation5], 4
      %s28 = int_to_ptr.vmem [resolvable:$true] %s27
      %33 = dma.hbm_to_vmem [thread:$0]  %s1, 1024, %s28, [#allocation6], 256, 256, 16
    $region9: #{tpu_custom_call.1} parent=1 // pred_fallthru
      _
    // Predicated region
    $region10: #{tpu_custom_call.1} parent=1 // pred_check
      _
    $region11: #{tpu_custom_call.1} parent=1 // pred_check_branch
      %35 = sbr.rel (0) target = $region13
    $region12: #{tpu_custom_call.1} parent=1 // pred_region
      %36 = dma.done [#allocation3], 256
    $region13: #{tpu_custom_call.1} parent=1 // pred_fallthru
      _
    // Predicated region
    $region14: #{tpu_custom_call.1} parent=1 // pred_check
      _
    $region15: #{tpu_custom_call.1} parent=1 // pred_check_branch
      %38 = sbr.rel (0) target = $region17
    $region16: #{tpu_custom_call.1} parent=1 // pred_region
      %39 = dma.done [#allocation6], 1024
    $region17: #{tpu_custom_call.1} parent=1 // pred_fallthru
      _
    %v40 = vld [vmem:[#allocation2] sm:$0xff]
    %v41 = vld [vmem:[#allocation2 + $0x8] sm:$0xff]
    %v42 = vld [vmem:[#allocation5] sm:$0xff]
    %v43 = vld [vmem:[#allocation5 + $0x8] sm:$0xff]
    %v44 = vld [vmem:[#allocation5 + $0x10] sm:$0xff]
    %v45 = vld [vmem:[#allocation5 + $0x18] sm:$0xff]
    %v46 = vld [vmem:[#allocation5 + $0x20] sm:$0xff]
    %v47 = vld [vmem:[#allocation5 + $0x28] sm:$0xff]
    %v48 = vld [vmem:[#allocation5 + $0x30] sm:$0xff]
    %v49 = vld [vmem:[#allocation5 + $0x38] sm:$0xff]
    %vm50 = vcmask 261120
    %v52 = vsel %vm50, %v40, 0
    %v55 = vsel %vm50, %v41, 0
    %57 = vmatprep.subr.mxu0 %v43
    %58 = vmatpush1.msra.mxu0 %v42
    %59 = vmatprep.subr.mxu0 %v45
    %60 = vmatpush1.msra.mxu0 %v44
    %61 = vmatprep.subr.mxu0 %v47
    %62 = vmatpush1.msra.mxu0 %v46
    %63 = vmatprep.subr.mxu0 %v49
    %64 = vmatpush1.msra.mxu0 %v48
    %65 = vmatprep.subr.mxu0 0.0
    %66 = vmatpush1.msra.mxu0 0.0
    %67 = vmatprep.subr.mxu0 0.0
    %68 = vmatpush1.msra.mxu0 0.0
    %69 = vmatprep.subr.mxu0 0.0
    %70 = vmatpush1.msra.mxu0 0.0
    %71 = vmatprep.subr.mxu0 0.0
    %72 = vmatpush1.msra.mxu0 0.0
    %73 = vmatprep.subr.mxu0 0.0
    %74 = vmatpush1.msra.mxu0 0.0
    %75 = vmatprep.subr.mxu0 0.0
    %76 = vmatpush1.msra.mxu0 0.0
    %77 = vmatprep.subr.mxu0 0.0
    %78 = vmatpush1.msra.mxu0 0.0
    %79 = vmatprep.subr.mxu0 0.0
    %80 = vmatpush1.msra.mxu0 0.0
    %81 = vmatprep.subr.mxu0 0.0
    %82 = vmatpush1.msra.mxu0 0.0
    %83 = vmatprep.subr.mxu0 0.0
    %84 = vmatpush1.msra.mxu0 0.0
    %85 = vmatprep.subr.mxu0 0.0
    %86 = vmatpush1.msra.mxu0 0.0
    %87 = vmatprep.subr.mxu0 0.0
    %88 = vmatpush1.msra.mxu0 0.0
    %89 = vmatprep.subr.mxu0 0.0
    %90 = vmatpush1.msra.mxu0 0.0
    %91 = vmatprep.subr.mxu0 0.0
    %92 = vmatpush1.msra.mxu0 0.0
    %93 = vmatprep.subr.mxu0 0.0
    %94 = vmatpush1.msra.mxu0 0.0
    %95 = vmatprep.subr.mxu0 0.0
    %96 = vmatpush1.msra.mxu0 0.0
    %97 = vmatprep.subr.mxu0 0.0
    %98 = vmatpush1.msra.mxu0 0.0
    %99 = vmatprep.subr.mxu0 0.0
    %100 = vmatpush1.msra.mxu0 0.0
    %101 = vmatprep.subr.mxu0 0.0
    %102 = vmatpush1.msra.mxu0 0.0
    %103 = vmatprep.subr.mxu0 0.0
    %104 = vmatpush1.msra.mxu0 0.0
    %105 = vmatprep.subr.mxu0 0.0
    %106 = vmatpush1.msra.mxu0 0.0
    %107 = vmatprep.subr.mxu0 0.0
    %108 = vmatpush1.msra.mxu0 0.0
    %109 = vmatprep.subr.mxu0 0.0
    %110 = vmatpush1.msra.mxu0 0.0
    %111 = vmatprep.subr.mxu0 0.0
    %112 = vmatpush1.msra.mxu0 0.0
    %113 = vmatprep.subr.mxu0 0.0
    %114 = vmatpush1.msra.mxu0 0.0
    %115 = vmatprep.subr.mxu0 0.0
    %116 = vmatpush1.msra.mxu0 0.0
    %117 = vmatprep.subr.mxu0 0.0
    %118 = vmatpush1.msra.mxu0 0.0
    %119 = vmatprep.subr.mxu0 0.0
    %120 = vmatpush1.msra.mxu0 0.0
    %121 = vmatprep.mubr.f32.mxu0 0.0
    %122 = vmatmul.mubr.f32.gmra.mrb[0].mxu0 %v52
    %v123 = vpop.f32.mrb[0].mxu0
    %v124 = vadd.f32 0.0, %v123
    %v125 = vpop.f32.mrb[0].mxu0
    %v126 = vadd.f32 0.0, %v125
    %127 = vmatprep.mubr.f32.mxu0 0.0
    %128 = vmatmul.mubr.f32.gmra.mrb[0].mxu0 %v55
    %v129 = vpop.f32.mrb[0].mxu0
    %v130 = vadd.f32 0.0, %v129
    %v131 = vpop.f32.mrb[0].mxu0
    %v132 = vadd.f32 0.0, %v131
    %133 = vdwg.mxu0
    %135 = vrot.lane.b32.xlu0 %v124, 64
    %v136 = vpop.permute.xlu0 %135
    %vm137 = vcmask 130048
    %v138 = vsel %vm137, %v124, 0
    %v140 = vsel %vm137, %v136, 0
    %142 = vmatprep.subr.mxu0 0.0
    %143 = vmatpush1.xpose.msra.mxu0 %v140
    %144 = vmatprep.subr.mxu0 0.0
    %145 = vmatpush1.xpose.msra.mxu0 0.0
    %146 = vmatprep.subr.mxu0 0.0
    %147 = vmatpush1.xpose.msra.mxu0 0.0
    %148 = vmatprep.subr.mxu0 0.0
    %149 = vmatpush1.xpose.msra.mxu0 0.0
    %150 = vmatprep.subr.mxu0 0.0
    %151 = vmatpush1.xpose.msra.mxu0 0.0
    %152 = vmatprep.subr.mxu0 0.0
    %153 = vmatpush1.xpose.msra.mxu0 0.0
    %154 = vmatprep.subr.mxu0 0.0
    %155 = vmatpush1.xpose.msra.mxu0 0.0
    %156 = vmatprep.subr.mxu0 0.0
    %157 = vmatpush1.xpose.msra.mxu0 0.0
    %158 = vmatprep.subr.mxu0 0.0
    %159 = vmatpush1.xpose.msra.mxu0 0.0
    %160 = vmatprep.subr.mxu0 0.0
    %161 = vmatpush1.xpose.msra.mxu0 0.0
    %162 = vmatprep.subr.mxu0 0.0
    %163 = vmatpush1.xpose.msra.mxu0 0.0
    %164 = vmatprep.subr.mxu0 0.0
    %165 = vmatpush1.xpose.msra.mxu0 0.0
    %166 = vmatprep.subr.mxu0 0.0
    %167 = vmatpush1.xpose.msra.mxu0 0.0
    %168 = vmatprep.subr.mxu0 0.0
    %169 = vmatpush1.xpose.msra.mxu0 0.0
    %170 = vmatprep.subr.mxu0 0.0
    %171 = vmatpush1.xpose.msra.mxu0 0.0
    %172 = vmatprep.subr.mxu0 0.0
    %173 = vmatpush1.xpose.msra.mxu0 0.0
    %174 = vmatprep.subr.mxu0 0.0
    %175 = vmatpush1.xpose.msra.mxu0 0.0
    %176 = vmatprep.subr.mxu0 0.0
    %177 = vmatpush1.xpose.msra.mxu0 0.0
    %178 = vmatprep.subr.mxu0 0.0
    %179 = vmatpush1.xpose.msra.mxu0 0.0
    %180 = vmatprep.subr.mxu0 0.0
    %181 = vmatpush1.xpose.msra.mxu0 0.0
    %182 = vmatprep.subr.mxu0 0.0
    %183 = vmatpush1.xpose.msra.mxu0 0.0
    %184 = vmatprep.subr.mxu0 0.0
    %185 = vmatpush1.xpose.msra.mxu0 0.0
    %186 = vmatprep.subr.mxu0 0.0
    %187 = vmatpush1.xpose.msra.mxu0 0.0
    %188 = vmatprep.subr.mxu0 0.0
    %189 = vmatpush1.xpose.msra.mxu0 0.0
    %190 = vmatprep.subr.mxu0 0.0
    %191 = vmatpush1.xpose.msra.mxu0 0.0
    %192 = vmatprep.subr.mxu0 0.0
    %193 = vmatpush1.xpose.msra.mxu0 0.0
    %194 = vmatprep.subr.mxu0 0.0
    %195 = vmatpush1.xpose.msra.mxu0 0.0
    %196 = vmatprep.subr.mxu0 0.0
    %197 = vmatpush1.xpose.msra.mxu0 0.0
    %198 = vmatprep.subr.mxu0 0.0
    %199 = vmatpush1.xpose.msra.mxu0 0.0
    %200 = vmatprep.subr.mxu0 0.0
    %201 = vmatpush1.xpose.msra.mxu0 0.0
    %202 = vmatprep.subr.mxu0 0.0
    %203 = vmatpush1.xpose.msra.mxu0 0.0
    %204 = vmatprep.subr.mxu0 0.0
    %205 = vmatpush1.xpose.msra.mxu0 0.0
    %206 = vmatprep.mubr.f32.mxu0 0.0
    %207 = vmatmul.mubr.f32.gmra.mrb[0].mxu0 %v138
    %v208 = vpop.f32.mrb[0].mxu0
    %v209 = vadd.f32 0.0, %v208
    %v210 = vpop.f32.mrb[0].mxu0
    %211 = vdwg.mxu0
    %213 = vrot.lane.b32.xlu0 %v130, 64
    %v214 = vpop.permute.xlu0 %213
    %v215 = vsel %vm137, %v130, 0
    %v217 = vsel %vm137, %v214, 0
    %219 = vmatprep.subr.mxu0 0.0
    %220 = vmatpush1.xpose.msra.mxu0 %v217
    %221 = vmatprep.subr.mxu0 0.0
    %222 = vmatpush1.xpose.msra.mxu0 0.0
    %223 = vmatprep.subr.mxu0 0.0
    %224 = vmatpush1.xpose.msra.mxu0 0.0
    %225 = vmatprep.subr.mxu0 0.0
    %226 = vmatpush1.xpose.msra.mxu0 0.0
    %227 = vmatprep.subr.mxu0 0.0
    %228 = vmatpush1.xpose.msra.mxu0 0.0
    %229 = vmatprep.subr.mxu0 0.0
    %230 = vmatpush1.xpose.msra.mxu0 0.0
    %231 = vmatprep.subr.mxu0 0.0
    %232 = vmatpush1.xpose.msra.mxu0 0.0
    %233 = vmatprep.subr.mxu0 0.0
    %234 = vmatpush1.xpose.msra.mxu0 0.0
    %235 = vmatprep.subr.mxu0 0.0
    %236 = vmatpush1.xpose.msra.mxu0 0.0
    %237 = vmatprep.subr.mxu0 0.0
    %238 = vmatpush1.xpose.msra.mxu0 0.0
    %239 = vmatprep.subr.mxu0 0.0
    %240 = vmatpush1.xpose.msra.mxu0 0.0
    %241 = vmatprep.subr.mxu0 0.0
    %242 = vmatpush1.xpose.msra.mxu0 0.0
    %243 = vmatprep.subr.mxu0 0.0
    %244 = vmatpush1.xpose.msra.mxu0 0.0
    %245 = vmatprep.subr.mxu0 0.0
    %246 = vmatpush1.xpose.msra.mxu0 0.0
    %247 = vmatprep.subr.mxu0 0.0
    %248 = vmatpush1.xpose.msra.mxu0 0.0
    %249 = vmatprep.subr.mxu0 0.0
    %250 = vmatpush1.xpose.msra.mxu0 0.0
    %251 = vmatprep.subr.mxu0 0.0
    %252 = vmatpush1.xpose.msra.mxu0 0.0
    %253 = vmatprep.subr.mxu0 0.0
    %254 = vmatpush1.xpose.msra.mxu0 0.0
    %255 = vmatprep.subr.mxu0 0.0
    %256 = vmatpush1.xpose.msra.mxu0 0.0
    %257 = vmatprep.subr.mxu0 0.0
    %258 = vmatpush1.xpose.msra.mxu0 0.0
    %259 = vmatprep.subr.mxu0 0.0
    %260 = vmatpush1.xpose.msra.mxu0 0.0
    %261 = vmatprep.subr.mxu0 0.0
    %262 = vmatpush1.xpose.msra.mxu0 0.0
    %263 = vmatprep.subr.mxu0 0.0
    %264 = vmatpush1.xpose.msra.mxu0 0.0
    %265 = vmatprep.subr.mxu0 0.0
    %266 = vmatpush1.xpose.msra.mxu0 0.0
    %267 = vmatprep.subr.mxu0 0.0
    %268 = vmatpush1.xpose.msra.mxu0 0.0
    %269 = vmatprep.subr.mxu0 0.0
    %270 = vmatpush1.xpose.msra.mxu0 0.0
    %271 = vmatprep.subr.mxu0 0.0
    %272 = vmatpush1.xpose.msra.mxu0 0.0
    %273 = vmatprep.subr.mxu0 0.0
    %274 = vmatpush1.xpose.msra.mxu0 0.0
    %275 = vmatprep.subr.mxu0 0.0
    %276 = vmatpush1.xpose.msra.mxu0 0.0
    %277 = vmatprep.subr.mxu0 0.0
    %278 = vmatpush1.xpose.msra.mxu0 0.0
    %279 = vmatprep.subr.mxu0 0.0
    %280 = vmatpush1.xpose.msra.mxu0 0.0
    %281 = vmatprep.subr.mxu0 0.0
    %282 = vmatpush1.xpose.msra.mxu0 0.0
    %283 = vmatprep.mubr.f32.mxu0 0.0
    %284 = vmatmul.mubr.f32.gmra.mrb[0].mxu0 %v215
    %v285 = vpop.f32.mrb[0].mxu0
    %v286 = vadd.f32 0.0, %v285
    %v287 = vpop.f32.mrb[0].mxu0
    %288 = vdwg.mxu0
    %vm289 = vcmask 64512
    %v290 = vsel %vm289, %v209, -inf
    %291 = vmax.xlane.f32.xlu0 %v290
    %v292 = vpop.xlane.xlu0 %291
    %v293 = vsel %vm289, %v286, -inf
    %294 = vmax.xlane.f32.xlu0 %v293
    %v295 = vpop.xlane.xlu0 %294
    %v296 = vsub.f32 %v209, %v292
    %v297 = vsub.f32 %v286, %v295
    %v298 = vmul.f32 %v296, 1.442695
    %v299 = vpow.pop %v298
    %v300 = vmul.f32 %v297, 1.442695
    %v301 = vpow.pop %v300
    %v302 = vsel %vm289, %v299, 0.0
    %303 = vadd.xlane.f32.xlu0 %v302
    %v304 = vpop.xlane.xlu0 %303
    %v305 = vsel %vm289, %v301, 0.0
    %306 = vadd.xlane.f32.xlu0 %v305
    %v307 = vpop.xlane.xlu0 %306
    %v308 = vrcp.pop %v304
    %v309 = vrcp.pop %v307
    %v310 = vmul.f32 %v299, %v308
    %v311 = vmul.f32 %v301, %v309
    %v313 = vsel %vm289, %v310, 0
    %315 = vmatprep.subr.mxu0 0.0
    %316 = vmatpush1.msra.mxu0 %v126
    %317 = vmatprep.subr.mxu0 0.0
    %318 = vmatpush1.msra.mxu0 0.0
    %319 = vmatprep.subr.mxu0 0.0
    %320 = vmatpush1.msra.mxu0 0.0
    %321 = vmatprep.subr.mxu0 0.0
    %322 = vmatpush1.msra.mxu0 0.0
    %323 = vmatprep.subr.mxu0 0.0
    %324 = vmatpush1.msra.mxu0 0.0
    %325 = vmatprep.subr.mxu0 0.0
    %326 = vmatpush1.msra.mxu0 0.0
    %327 = vmatprep.subr.mxu0 0.0
    %328 = vmatpush1.msra.mxu0 0.0
    %329 = vmatprep.subr.mxu0 0.0
    %330 = vmatpush1.msra.mxu0 0.0
    %331 = vmatprep.subr.mxu0 0.0
    %332 = vmatpush1.msra.mxu0 0.0
    %333 = vmatprep.subr.mxu0 0.0
    %334 = vmatpush1.msra.mxu0 0.0
    %335 = vmatprep.subr.mxu0 0.0
    %336 = vmatpush1.msra.mxu0 0.0
    %337 = vmatprep.subr.mxu0 0.0
    %338 = vmatpush1.msra.mxu0 0.0
    %339 = vmatprep.subr.mxu0 0.0
    %340 = vmatpush1.msra.mxu0 0.0
    %341 = vmatprep.subr.mxu0 0.0
    %342 = vmatpush1.msra.mxu0 0.0
    %343 = vmatprep.subr.mxu0 0.0
    %344 = vmatpush1.msra.mxu0 0.0
    %345 = vmatprep.subr.mxu0 0.0
    %346 = vmatpush1.msra.mxu0 0.0
    %347 = vmatprep.subr.mxu0 0.0
    %348 = vmatpush1.msra.mxu0 0.0
    %349 = vmatprep.subr.mxu0 0.0
    %350 = vmatpush1.msra.mxu0 0.0
    %351 = vmatprep.subr.mxu0 0.0
    %352 = vmatpush1.msra.mxu0 0.0
    %353 = vmatprep.subr.mxu0 0.0
    %354 = vmatpush1.msra.mxu0 0.0
    %355 = vmatprep.subr.mxu0 0.0
    %356 = vmatpush1.msra.mxu0 0.0
    %357 = vmatprep.subr.mxu0 0.0
    %358 = vmatpush1.msra.mxu0 0.0
    %359 = vmatprep.subr.mxu0 0.0
    %360 = vmatpush1.msra.mxu0 0.0
    %361 = vmatprep.subr.mxu0 0.0
    %362 = vmatpush1.msra.mxu0 0.0
    %363 = vmatprep.subr.mxu0 0.0
    %364 = vmatpush1.msra.mxu0 0.0
    %365 = vmatprep.subr.mxu0 0.0
    %366 = vmatpush1.msra.mxu0 0.0
    %367 = vmatprep.subr.mxu0 0.0
    %368 = vmatpush1.msra.mxu0 0.0
    %369 = vmatprep.subr.mxu0 0.0
    %370 = vmatpush1.msra.mxu0 0.0
    %371 = vmatprep.subr.mxu0 0.0
    %372 = vmatpush1.msra.mxu0 0.0
    %373 = vmatprep.subr.mxu0 0.0
    %374 = vmatpush1.msra.mxu0 0.0
    %375 = vmatprep.subr.mxu0 0.0
    %376 = vmatpush1.msra.mxu0 0.0
    %377 = vmatprep.subr.mxu0 0.0
    %378 = vmatpush1.msra.mxu0 0.0
    %379 = vmatprep.mubr.f32.mxu0 0.0
    %380 = vmatmul.mubr.f32.gmra.mrb[0].mxu0 %v313
    %v381 = vpop.f32.mrb[0].mxu0
    %v382 = vadd.f32 0.0, %v381
    %v383 = vpop.f32.mrb[0].mxu0
    %384 = vdwg.mxu0
    %v386 = vsel %vm289, %v311, 0
    %388 = vmatprep.subr.mxu0 0.0
    %389 = vmatpush1.msra.mxu0 %v132
    %390 = vmatprep.subr.mxu0 0.0
    %391 = vmatpush1.msra.mxu0 0.0
    %392 = vmatprep.subr.mxu0 0.0
    %393 = vmatpush1.msra.mxu0 0.0
    %394 = vmatprep.subr.mxu0 0.0
    %395 = vmatpush1.msra.mxu0 0.0
    %396 = vmatprep.subr.mxu0 0.0
    %397 = vmatpush1.msra.mxu0 0.0
    %398 = vmatprep.subr.mxu0 0.0
    %399 = vmatpush1.msra.mxu0 0.0
    %400 = vmatprep.subr.mxu0 0.0
    %401 = vmatpush1.msra.mxu0 0.0
    %402 = vmatprep.subr.mxu0 0.0
    %403 = vmatpush1.msra.mxu0 0.0
    %404 = vmatprep.subr.mxu0 0.0
    %405 = vmatpush1.msra.mxu0 0.0
    %406 = vmatprep.subr.mxu0 0.0
    %407 = vmatpush1.msra.mxu0 0.0
    %408 = vmatprep.subr.mxu0 0.0
    %409 = vmatpush1.msra.mxu0 0.0
    %410 = vmatprep.subr.mxu0 0.0
    %411 = vmatpush1.msra.mxu0 0.0
    %412 = vmatprep.subr.mxu0 0.0
    %413 = vmatpush1.msra.mxu0 0.0
    %414 = vmatprep.subr.mxu0 0.0
    %415 = vmatpush1.msra.mxu0 0.0
    %416 = vmatprep.subr.mxu0 0.0
    %417 = vmatpush1.msra.mxu0 0.0
    %418 = vmatprep.subr.mxu0 0.0
    %419 = vmatpush1.msra.mxu0 0.0
    %420 = vmatprep.subr.mxu0 0.0
    %421 = vmatpush1.msra.mxu0 0.0
    %422 = vmatprep.subr.mxu0 0.0
    %423 = vmatpush1.msra.mxu0 0.0
    %424 = vmatprep.subr.mxu0 0.0
    %425 = vmatpush1.msra.mxu0 0.0
    %426 = vmatprep.subr.mxu0 0.0
    %427 = vmatpush1.msra.mxu0 0.0
    %428 = vmatprep.subr.mxu0 0.0
    %429 = vmatpush1.msra.mxu0 0.0
    %430 = vmatprep.subr.mxu0 0.0
    %431 = vmatpush1.msra.mxu0 0.0
    %432 = vmatprep.subr.mxu0 0.0
    %433 = vmatpush1.msra.mxu0 0.0
    %434 = vmatprep.subr.mxu0 0.0
    %435 = vmatpush1.msra.mxu0 0.0
    %436 = vmatprep.subr.mxu0 0.0
    %437 = vmatpush1.msra.mxu0 0.0
    %438 = vmatprep.subr.mxu0 0.0
    %439 = vmatpush1.msra.mxu0 0.0
    %440 = vmatprep.subr.mxu0 0.0
    %441 = vmatpush1.msra.mxu0 0.0
    %442 = vmatprep.subr.mxu0 0.0
    %443 = vmatpush1.msra.mxu0 0.0
    %444 = vmatprep.subr.mxu0 0.0
    %445 = vmatpush1.msra.mxu0 0.0
    %446 = vmatprep.subr.mxu0 0.0
    %447 = vmatpush1.msra.mxu0 0.0
    %448 = vmatprep.subr.mxu0 0.0
    %449 = vmatpush1.msra.mxu0 0.0
    %450 = vmatprep.subr.mxu0 0.0
    %451 = vmatpush1.msra.mxu0 0.0
    %452 = vmatprep.mubr.f32.mxu0 0.0
    %453 = vmatmul.mubr.f32.gmra.mrb[0].mxu0 %v386
    %v454 = vpop.f32.mrb[0].mxu0
    %v455 = vadd.f32 0.0, %v454
    %v456 = vpop.f32.mrb[0].mxu0
    %457 = vdwg.mxu0
    %458 = vrot.lane.b32.xlu0 %v124, 112
    %v459 = vpop.permute.xlu0 %458
    %460 = vrot.lane.b32.xlu0 %v124, 48
    %v461 = vpop.permute.xlu0 %460
    %v462 = vsel %vm137, %v459, 0
    %v464 = vsel %vm137, %v461, 0
    %466 = vmatprep.subr.mxu0 0.0
    %467 = vmatpush1.xpose.msra.mxu0 %v464
    %468 = vmatprep.subr.mxu0 0.0
    %469 = vmatpush1.xpose.msra.mxu0 0.0
    %470 = vmatprep.subr.mxu0 0.0
    %471 = vmatpush1.xpose.msra.mxu0 0.0
    %472 = vmatprep.subr.mxu0 0.0
    %473 = vmatpush1.xpose.msra.mxu0 0.0
    %474 = vmatprep.subr.mxu0 0.0
    %475 = vmatpush1.xpose.msra.mxu0 0.0
    %476 = vmatprep.subr.mxu0 0.0
    %477 = vmatpush1.xpose.msra.mxu0 0.0
    %478 = vmatprep.subr.mxu0 0.0
    %479 = vmatpush1.xpose.msra.mxu0 0.0
    %480 = vmatprep.subr.mxu0 0.0
    %481 = vmatpush1.xpose.msra.mxu0 0.0
    %482 = vmatprep.subr.mxu0 0.0
    %483 = vmatpush1.xpose.msra.mxu0 0.0
    %484 = vmatprep.subr.mxu0 0.0
    %485 = vmatpush1.xpose.msra.mxu0 0.0
    %486 = vmatprep.subr.mxu0 0.0
    %487 = vmatpush1.xpose.msra.mxu0 0.0
    %488 = vmatprep.subr.mxu0 0.0
    %489 = vmatpush1.xpose.msra.mxu0 0.0
    %490 = vmatprep.subr.mxu0 0.0
    %491 = vmatpush1.xpose.msra.mxu0 0.0
    %492 = vmatprep.subr.mxu0 0.0
    %493 = vmatpush1.xpose.msra.mxu0 0.0
    %494 = vmatprep.subr.mxu0 0.0
    %495 = vmatpush1.xpose.msra.mxu0 0.0
    %496 = vmatprep.subr.mxu0 0.0
    %497 = vmatpush1.xpose.msra.mxu0 0.0
    %498 = vmatprep.subr.mxu0 0.0
    %499 = vmatpush1.xpose.msra.mxu0 0.0
    %500 = vmatprep.subr.mxu0 0.0
    %501 = vmatpush1.xpose.msra.mxu0 0.0
    %502 = vmatprep.subr.mxu0 0.0
    %503 = vmatpush1.xpose.msra.mxu0 0.0
    %504 = vmatprep.subr.mxu0 0.0
    %505 = vmatpush1.xpose.msra.mxu0 0.0
    %506 = vmatprep.subr.mxu0 0.0
    %507 = vmatpush1.xpose.msra.mxu0 0.0
    %508 = vmatprep.subr.mxu0 0.0
    %509 = vmatpush1.xpose.msra.mxu0 0.0
    %510 = vmatprep.subr.mxu0 0.0
    %511 = vmatpush1.xpose.msra.mxu0 0.0
    %512 = vmatprep.subr.mxu0 0.0
    %513 = vmatpush1.xpose.msra.mxu0 0.0
    %514 = vmatprep.subr.mxu0 0.0
    %515 = vmatpush1.xpose.msra.mxu0 0.0
    %516 = vmatprep.subr.mxu0 0.0
    %517 = vmatpush1.xpose.msra.mxu0 0.0
    %518 = vmatprep.subr.mxu0 0.0
    %519 = vmatpush1.xpose.msra.mxu0 0.0
    %520 = vmatprep.subr.mxu0 0.0
    %521 = vmatpush1.xpose.msra.mxu0 0.0
    %522 = vmatprep.subr.mxu0 0.0
    %523 = vmatpush1.xpose.msra.mxu0 0.0
    %524 = vmatprep.subr.mxu0 0.0
    %525 = vmatpush1.xpose.msra.mxu0 0.0
    %526 = vmatprep.subr.mxu0 0.0
    %527 = vmatpush1.xpose.msra.mxu0 0.0
    %528 = vmatprep.subr.mxu0 0.0
    %529 = vmatpush1.xpose.msra.mxu0 0.0
    %530 = vmatprep.mubr.f32.mxu0 0.0
    %531 = vmatmul.mubr.f32.gmra.mrb[0].mxu0 %v462
    %v532 = vpop.f32.mrb[0].mxu0
    %v533 = vadd.f32 0.0, %v532
    %v534 = vpop.f32.mrb[0].mxu0
    %535 = vdwg.mxu0
    %536 = vrot.lane.b32.xlu0 %v130, 112
    %v537 = vpop.permute.xlu0 %536
    %538 = vrot.lane.b32.xlu0 %v130, 48
    %v539 = vpop.permute.xlu0 %538
    %v540 = vsel %vm137, %v537, 0
    %v542 = vsel %vm137, %v539, 0
    %544 = vmatprep.subr.mxu0 0.0
    %545 = vmatpush1.xpose.msra.mxu0 %v542
    %546 = vmatprep.subr.mxu0 0.0
    %547 = vmatpush1.xpose.msra.mxu0 0.0
    %548 = vmatprep.subr.mxu0 0.0
    %549 = vmatpush1.xpose.msra.mxu0 0.0
    %550 = vmatprep.subr.mxu0 0.0
    %551 = vmatpush1.xpose.msra.mxu0 0.0
    %552 = vmatprep.subr.mxu0 0.0
    %553 = vmatpush1.xpose.msra.mxu0 0.0
    %554 = vmatprep.subr.mxu0 0.0
    %555 = vmatpush1.xpose.msra.mxu0 0.0
    %556 = vmatprep.subr.mxu0 0.0
    %557 = vmatpush1.xpose.msra.mxu0 0.0
    %558 = vmatprep.subr.mxu0 0.0
    %559 = vmatpush1.xpose.msra.mxu0 0.0
    %560 = vmatprep.subr.mxu0 0.0
    %561 = vmatpush1.xpose.msra.mxu0 0.0
    %562 = vmatprep.subr.mxu0 0.0
    %563 = vmatpush1.xpose.msra.mxu0 0.0
    %564 = vmatprep.subr.mxu0 0.0
    %565 = vmatpush1.xpose.msra.mxu0 0.0
    %566 = vmatprep.subr.mxu0 0.0
    %567 = vmatpush1.xpose.msra.mxu0 0.0
    %568 = vmatprep.subr.mxu0 0.0
    %569 = vmatpush1.xpose.msra.mxu0 0.0
    %570 = vmatprep.subr.mxu0 0.0
    %571 = vmatpush1.xpose.msra.mxu0 0.0
    %572 = vmatprep.subr.mxu0 0.0
    %573 = vmatpush1.xpose.msra.mxu0 0.0
    %574 = vmatprep.subr.mxu0 0.0
    %575 = vmatpush1.xpose.msra.mxu0 0.0
    %576 = vmatprep.subr.mxu0 0.0
    %577 = vmatpush1.xpose.msra.mxu0 0.0
    %578 = vmatprep.subr.mxu0 0.0
    %579 = vmatpush1.xpose.msra.mxu0 0.0
    %580 = vmatprep.subr.mxu0 0.0
    %581 = vmatpush1.xpose.msra.mxu0 0.0
    %582 = vmatprep.subr.mxu0 0.0
    %583 = vmatpush1.xpose.msra.mxu0 0.0
    %584 = vmatprep.subr.mxu0 0.0
    %585 = vmatpush1.xpose.msra.mxu0 0.0
    %586 = vmatprep.subr.mxu0 0.0
    %587 = vmatpush1.xpose.msra.mxu0 0.0
    %588 = vmatprep.subr.mxu0 0.0
    %589 = vmatpush1.xpose.msra.mxu0 0.0
    %590 = vmatprep.subr.mxu0 0.0
    %591 = vmatpush1.xpose.msra.mxu0 0.0
    %592 = vmatprep.subr.mxu0 0.0
    %593 = vmatpush1.xpose.msra.mxu0 0.0
    %594 = vmatprep.subr.mxu0 0.0
    %595 = vmatpush1.xpose.msra.mxu0 0.0
    %596 = vmatprep.subr.mxu0 0.0
    %597 = vmatpush1.xpose.msra.mxu0 0.0
    %598 = vmatprep.subr.mxu0 0.0
    %599 = vmatpush1.xpose.msra.mxu0 0.0
    %600 = vmatprep.subr.mxu0 0.0
    %601 = vmatpush1.xpose.msra.mxu0 0.0
    %602 = vmatprep.subr.mxu0 0.0
    %603 = vmatpush1.xpose.msra.mxu0 0.0
    %604 = vmatprep.subr.mxu0 0.0
    %605 = vmatpush1.xpose.msra.mxu0 0.0
    %606 = vmatprep.subr.mxu0 0.0
    %607 = vmatpush1.xpose.msra.mxu0 0.0
    %608 = vmatprep.mubr.f32.mxu0 0.0
    %609 = vmatmul.mubr.f32.gmra.mrb[0].mxu0 %v540
    %v610 = vpop.f32.mrb[0].mxu0
    %v611 = vadd.f32 0.0, %v610
    %v612 = vpop.f32.mrb[0].mxu0
    %613 = vdwg.mxu0
    %v614 = vsel %vm289, %v533, -inf
    %615 = vmax.xlane.f32.xlu0 %v614
    %v616 = vpop.xlane.xlu0 %615
    %v617 = vsel %vm289, %v611, -inf
    %618 = vmax.xlane.f32.xlu0 %v617
    %v619 = vpop.xlane.xlu0 %618
    %v620 = vsub.f32 %v533, %v616
    %v621 = vsub.f32 %v611, %v619
    %v622 = vmul.f32 %v620, 1.442695
    %v623 = vpow.pop %v622
    %v624 = vmul.f32 %v621, 1.442695
    %v625 = vpow.pop %v624
    %v626 = vsel %vm289, %v623, 0.0
    %627 = vadd.xlane.f32.xlu0 %v626
    %v628 = vpop.xlane.xlu0 %627
    %v629 = vsel %vm289, %v625, 0.0
    %630 = vadd.xlane.f32.xlu0 %v629
    %v631 = vpop.xlane.xlu0 %630
    %v632 = vrcp.pop %v628
    %v633 = vrcp.pop %v631
    %v634 = vmul.f32 %v623, %v632
    %v635 = vmul.f32 %v625, %v633
    %637 = vrot.lane.b32.xlu0 %v126, 112
    %v638 = vpop.permute.xlu0 %637
    %v641 = vsel %vm289, %v634, 0
    %643 = vmatprep.subr.mxu0 0.0
    %644 = vmatpush1.msra.mxu0 %v638
    %645 = vmatprep.subr.mxu0 0.0
    %646 = vmatpush1.msra.mxu0 0.0
    %647 = vmatprep.subr.mxu0 0.0
    %648 = vmatpush1.msra.mxu0 0.0
    %649 = vmatprep.subr.mxu0 0.0
    %650 = vmatpush1.msra.mxu0 0.0
    %651 = vmatprep.subr.mxu0 0.0
    %652 = vmatpush1.msra.mxu0 0.0
    %653 = vmatprep.subr.mxu0 0.0
    %654 = vmatpush1.msra.mxu0 0.0
    %655 = vmatprep.subr.mxu0 0.0
    %656 = vmatpush1.msra.mxu0 0.0
    %657 = vmatprep.subr.mxu0 0.0
    %658 = vmatpush1.msra.mxu0 0.0
    %659 = vmatprep.subr.mxu0 0.0
    %660 = vmatpush1.msra.mxu0 0.0
    %661 = vmatprep.subr.mxu0 0.0
    %662 = vmatpush1.msra.mxu0 0.0
    %663 = vmatprep.subr.mxu0 0.0
    %664 = vmatpush1.msra.mxu0 0.0
    %665 = vmatprep.subr.mxu0 0.0
    %666 = vmatpush1.msra.mxu0 0.0
    %667 = vmatprep.subr.mxu0 0.0
    %668 = vmatpush1.msra.mxu0 0.0
    %669 = vmatprep.subr.mxu0 0.0
    %670 = vmatpush1.msra.mxu0 0.0
    %671 = vmatprep.subr.mxu0 0.0
    %672 = vmatpush1.msra.mxu0 0.0
    %673 = vmatprep.subr.mxu0 0.0
    %674 = vmatpush1.msra.mxu0 0.0
    %675 = vmatprep.subr.mxu0 0.0
    %676 = vmatpush1.msra.mxu0 0.0
    %677 = vmatprep.subr.mxu0 0.0
    %678 = vmatpush1.msra.mxu0 0.0
    %679 = vmatprep.subr.mxu0 0.0
    %680 = vmatpush1.msra.mxu0 0.0
    %681 = vmatprep.subr.mxu0 0.0
    %682 = vmatpush1.msra.mxu0 0.0
    %683 = vmatprep.subr.mxu0 0.0
    %684 = vmatpush1.msra.mxu0 0.0
    %685 = vmatprep.subr.mxu0 0.0
    %686 = vmatpush1.msra.mxu0 0.0
    %687 = vmatprep.subr.mxu0 0.0
    %688 = vmatpush1.msra.mxu0 0.0
    %689 = vmatprep.subr.mxu0 0.0
    %690 = vmatpush1.msra.mxu0 0.0
    %691 = vmatprep.subr.mxu0 0.0
    %692 = vmatpush1.msra.mxu0 0.0
    %693 = vmatprep.subr.mxu0 0.0
    %694 = vmatpush1.msra.mxu0 0.0
    %695 = vmatprep.subr.mxu0 0.0
    %696 = vmatpush1.msra.mxu0 0.0
    %697 = vmatprep.subr.mxu0 0.0
    %698 = vmatpush1.msra.mxu0 0.0
    %699 = vmatprep.subr.mxu0 0.0
    %700 = vmatpush1.msra.mxu0 0.0
    %701 = vmatprep.subr.mxu0 0.0
    %702 = vmatpush1.msra.mxu0 0.0
    %703 = vmatprep.subr.mxu0 0.0
    %704 = vmatpush1.msra.mxu0 0.0
    %705 = vmatprep.subr.mxu0 0.0
    %706 = vmatpush1.msra.mxu0 0.0
    %707 = vmatprep.mubr.f32.mxu0 0.0
    %708 = vmatmul.mubr.f32.gmra.mrb[0].mxu0 %v641
    %v709 = vpop.f32.mrb[0].mxu0
    %v710 = vadd.f32 0.0, %v709
    %v711 = vpop.f32.mrb[0].mxu0
    %712 = vdwg.mxu0
    %714 = vrot.lane.b32.xlu0 %v132, 112
    %v715 = vpop.permute.xlu0 %714
    %v718 = vsel %vm289, %v635, 0
    %720 = vmatprep.subr.mxu0 0.0
    %721 = vmatpush1.msra.mxu0 %v715
    %722 = vmatprep.subr.mxu0 0.0
    %723 = vmatpush1.msra.mxu0 0.0
    %724 = vmatprep.subr.mxu0 0.0
    %725 = vmatpush1.msra.mxu0 0.0
    %726 = vmatprep.subr.mxu0 0.0
    %727 = vmatpush1.msra.mxu0 0.0
    %728 = vmatprep.subr.mxu0 0.0
    %729 = vmatpush1.msra.mxu0 0.0
    %730 = vmatprep.subr.mxu0 0.0
    %731 = vmatpush1.msra.mxu0 0.0
    %732 = vmatprep.subr.mxu0 0.0
    %733 = vmatpush1.msra.mxu0 0.0
    %734 = vmatprep.subr.mxu0 0.0
    %735 = vmatpush1.msra.mxu0 0.0
    %736 = vmatprep.subr.mxu0 0.0
    %737 = vmatpush1.msra.mxu0 0.0
    %738 = vmatprep.subr.mxu0 0.0
    %739 = vmatpush1.msra.mxu0 0.0
    %740 = vmatprep.subr.mxu0 0.0
    %741 = vmatpush1.msra.mxu0 0.0
    %742 = vmatprep.subr.mxu0 0.0
    %743 = vmatpush1.msra.mxu0 0.0
    %744 = vmatprep.subr.mxu0 0.0
    %745 = vmatpush1.msra.mxu0 0.0
    %746 = vmatprep.subr.mxu0 0.0
    %747 = vmatpush1.msra.mxu0 0.0
    %748 = vmatprep.subr.mxu0 0.0
    %749 = vmatpush1.msra.mxu0 0.0
    %750 = vmatprep.subr.mxu0 0.0
    %751 = vmatpush1.msra.mxu0 0.0
    %752 = vmatprep.subr.mxu0 0.0
    %753 = vmatpush1.msra.mxu0 0.0
    %754 = vmatprep.subr.mxu0 0.0
    %755 = vmatpush1.msra.mxu0 0.0
    %756 = vmatprep.subr.mxu0 0.0
    %757 = vmatpush1.msra.mxu0 0.0
    %758 = vmatprep.subr.mxu0 0.0
    %759 = vmatpush1.msra.mxu0 0.0
    %760 = vmatprep.subr.mxu0 0.0
    %761 = vmatpush1.msra.mxu0 0.0
    %762 = vmatprep.subr.mxu0 0.0
    %763 = vmatpush1.msra.mxu0 0.0
    %764 = vmatprep.subr.mxu0 0.0
    %765 = vmatpush1.msra.mxu0 0.0
    %766 = vmatprep.subr.mxu0 0.0
    %767 = vmatpush1.msra.mxu0 0.0
    %768 = vmatprep.subr.mxu0 0.0
    %769 = vmatpush1.msra.mxu0 0.0
    %770 = vmatprep.subr.mxu0 0.0
    %771 = vmatpush1.msra.mxu0 0.0
    %772 = vmatprep.subr.mxu0 0.0
    %773 = vmatpush1.msra.mxu0 0.0
    %774 = vmatprep.subr.mxu0 0.0
    %775 = vmatpush1.msra.mxu0 0.0
    %776 = vmatprep.subr.mxu0 0.0
    %777 = vmatpush1.msra.mxu0 0.0
    %778 = vmatprep.subr.mxu0 0.0
    %779 = vmatpush1.msra.mxu0 0.0
    %780 = vmatprep.subr.mxu0 0.0
    %781 = vmatpush1.msra.mxu0 0.0
    %782 = vmatprep.subr.mxu0 0.0
    %783 = vmatpush1.msra.mxu0 0.0
    %784 = vmatprep.mubr.f32.mxu0 0.0
    %785 = vmatmul.mubr.f32.gmra.mrb[0].mxu0 %v718
    %v786 = vpop.f32.mrb[0].mxu0
    %v787 = vadd.f32 0.0, %v786
    %v788 = vpop.f32.mrb[0].mxu0
    %789 = vdwg.mxu0
    %790 = vrot.lane.b32.xlu0 %v124, 96
    %v791 = vpop.permute.xlu0 %790
    %792 = vrot.lane.b32.xlu0 %v124, 32
    %v793 = vpop.permute.xlu0 %792
    %v794 = vsel %vm137, %v791, 0
    %v796 = vsel %vm137, %v793, 0
    %798 = vmatprep.subr.mxu0 0.0
    %799 = vmatpush1.xpose.msra.mxu0 %v796
    %800 = vmatprep.subr.mxu0 0.0
    %801 = vmatpush1.xpose.msra.mxu0 0.0
    %802 = vmatprep.subr.mxu0 0.0
    %803 = vmatpush1.xpose.msra.mxu0 0.0
    %804 = vmatprep.subr.mxu0 0.0
    %805 = vmatpush1.xpose.msra.mxu0 0.0
    %806 = vmatprep.subr.mxu0 0.0
    %807 = vmatpush1.xpose.msra.mxu0 0.0
    %808 = vmatprep.subr.mxu0 0.0
    %809 = vmatpush1.xpose.msra.mxu0 0.0
    %810 = vmatprep.subr.mxu0 0.0
    %811 = vmatpush1.xpose.msra.mxu0 0.0
    %812 = vmatprep.subr.mxu0 0.0
    %813 = vmatpush1.xpose.msra.mxu0 0.0
    %814 = vmatprep.subr.mxu0 0.0
    %815 = vmatpush1.xpose.msra.mxu0 0.0
    %816 = vmatprep.subr.mxu0 0.0
    %817 = vmatpush1.xpose.msra.mxu0 0.0
    %818 = vmatprep.subr.mxu0 0.0
    %819 = vmatpush1.xpose.msra.mxu0 0.0
    %820 = vmatprep.subr.mxu0 0.0
    %821 = vmatpush1.xpose.msra.mxu0 0.0
    %822 = vmatprep.subr.mxu0 0.0
    %823 = vmatpush1.xpose.msra.mxu0 0.0
    %824 = vmatprep.subr.mxu0 0.0
    %825 = vmatpush1.xpose.msra.mxu0 0.0
    %826 = vmatprep.subr.mxu0 0.0
    %827 = vmatpush1.xpose.msra.mxu0 0.0
    %828 = vmatprep.subr.mxu0 0.0
    %829 = vmatpush1.xpose.msra.mxu0 0.0
    %830 = vmatprep.subr.mxu0 0.0
    %831 = vmatpush1.xpose.msra.mxu0 0.0
    %832 = vmatprep.subr.mxu0 0.0
    %833 = vmatpush1.xpose.msra.mxu0 0.0
    %834 = vmatprep.subr.mxu0 0.0
    %835 = vmatpush1.xpose.msra.mxu0 0.0
    %836 = vmatprep.subr.mxu0 0.0
    %837 = vmatpush1.xpose.msra.mxu0 0.0
    %838 = vmatprep.subr.mxu0 0.0
    %839 = vmatpush1.xpose.msra.mxu0 0.0
    %840 = vmatprep.subr.mxu0 0.0
    %841 = vmatpush1.xpose.msra.mxu0 0.0
    %842 = vmatprep.subr.mxu0 0.0
    %843 = vmatpush1.xpose.msra.mxu0 0.0
    %844 = vmatprep.subr.mxu0 0.0
    %845 = vmatpush1.xpose.msra.mxu0 0.0
    %846 = vmatprep.subr.mxu0 0.0
    %847 = vmatpush1.xpose.msra.mxu0 0.0
    %848 = vmatprep.subr.mxu0 0.0
    %849 = vmatpush1.xpose.msra.mxu0 0.0
    %850 = vmatprep.subr.mxu0 0.0
    %851 = vmatpush1.xpose.msra.mxu0 0.0
    %852 = vmatprep.subr.mxu0 0.0
    %853 = vmatpush1.xpose.msra.mxu0 0.0
    %854 = vmatprep.subr.mxu0 0.0
    %855 = vmatpush1.xpose.msra.mxu0 0.0
    %856 = vmatprep.subr.mxu0 0.0
    %857 = vmatpush1.xpose.msra.mxu0 0.0
    %858 = vmatprep.subr.mxu0 0.0
    %859 = vmatpush1.xpose.msra.mxu0 0.0
    %860 = vmatprep.subr.mxu0 0.0
    %861 = vmatpush1.xpose.msra.mxu0 0.0
    %862 = vmatprep.mubr.f32.mxu0 0.0
    %863 = vmatmul.mubr.f32.gmra.mrb[0].mxu0 %v794
    %v864 = vpop.f32.mrb[0].mxu0
    %v865 = vadd.f32 0.0, %v864
    %v866 = vpop.f32.mrb[0].mxu0
    %867 = vdwg.mxu0
    %868 = vrot.lane.b32.xlu0 %v130, 96
    %v869 = vpop.permute.xlu0 %868
    %870 = vrot.lane.b32.xlu0 %v130, 32
    %v871 = vpop.permute.xlu0 %870
    %v872 = vsel %vm137, %v869, 0
    %v874 = vsel %vm137, %v871, 0
    %876 = vmatprep.subr.mxu0 0.0
    %877 = vmatpush1.xpose.msra.mxu0 %v874
    %878 = vmatprep.subr.mxu0 0.0
    %879 = vmatpush1.xpose.msra.mxu0 0.0
    %880 = vmatprep.subr.mxu0 0.0
    %881 = vmatpush1.xpose.msra.mxu0 0.0
    %882 = vmatprep.subr.mxu0 0.0
    %883 = vmatpush1.xpose.msra.mxu0 0.0
    %884 = vmatprep.subr.mxu0 0.0
    %885 = vmatpush1.xpose.msra.mxu0 0.0
    %886 = vmatprep.subr.mxu0 0.0
    %887 = vmatpush1.xpose.msra.mxu0 0.0
    %888 = vmatprep.subr.mxu0 0.0
    %889 = vmatpush1.xpose.msra.mxu0 0.0
    %890 = vmatprep.subr.mxu0 0.0
    %891 = vmatpush1.xpose.msra.mxu0 0.0
    %892 = vmatprep.subr.mxu0 0.0
    %893 = vmatpush1.xpose.msra.mxu0 0.0
    %894 = vmatprep.subr.mxu0 0.0
    %895 = vmatpush1.xpose.msra.mxu0 0.0
    %896 = vmatprep.subr.mxu0 0.0
    %897 = vmatpush1.xpose.msra.mxu0 0.0
    %898 = vmatprep.subr.mxu0 0.0
    %899 = vmatpush1.xpose.msra.mxu0 0.0
    %900 = vmatprep.subr.mxu0 0.0
    %901 = vmatpush1.xpose.msra.mxu0 0.0
    %902 = vmatprep.subr.mxu0 0.0
    %903 = vmatpush1.xpose.msra.mxu0 0.0
    %904 = vmatprep.subr.mxu0 0.0
    %905 = vmatpush1.xpose.msra.mxu0 0.0
    %906 = vmatprep.subr.mxu0 0.0
    %907 = vmatpush1.xpose.msra.mxu0 0.0
    %908 = vmatprep.subr.mxu0 0.0
    %909 = vmatpush1.xpose.msra.mxu0 0.0
    %910 = vmatprep.subr.mxu0 0.0
    %911 = vmatpush1.xpose.msra.mxu0 0.0
    %912 = vmatprep.subr.mxu0 0.0
    %913 = vmatpush1.xpose.msra.mxu0 0.0
    %914 = vmatprep.subr.mxu0 0.0
    %915 = vmatpush1.xpose.msra.mxu0 0.0
    %916 = vmatprep.subr.mxu0 0.0
    %917 = vmatpush1.xpose.msra.mxu0 0.0
    %918 = vmatprep.subr.mxu0 0.0
    %919 = vmatpush1.xpose.msra.mxu0 0.0
    %920 = vmatprep.subr.mxu0 0.0
    %921 = vmatpush1.xpose.msra.mxu0 0.0
    %922 = vmatprep.subr.mxu0 0.0
    %923 = vmatpush1.xpose.msra.mxu0 0.0
    %924 = vmatprep.subr.mxu0 0.0
    %925 = vmatpush1.xpose.msra.mxu0 0.0
    %926 = vmatprep.subr.mxu0 0.0
    %927 = vmatpush1.xpose.msra.mxu0 0.0
    %928 = vmatprep.subr.mxu0 0.0
    %929 = vmatpush1.xpose.msra.mxu0 0.0
    %930 = vmatprep.subr.mxu0 0.0
    %931 = vmatpush1.xpose.msra.mxu0 0.0
    %932 = vmatprep.subr.mxu0 0.0
    %933 = vmatpush1.xpose.msra.mxu0 0.0
    %934 = vmatprep.subr.mxu0 0.0
    %935 = vmatpush1.xpose.msra.mxu0 0.0
    %936 = vmatprep.subr.mxu0 0.0
    %937 = vmatpush1.xpose.msra.mxu0 0.0
    %938 = vmatprep.subr.mxu0 0.0
    %939 = vmatpush1.xpose.msra.mxu0 0.0
    %940 = vmatprep.mubr.f32.mxu0 0.0
    %941 = vmatmul.mubr.f32.gmra.mrb[0].mxu0 %v872
    %v942 = vpop.f32.mrb[0].mxu0
    %v943 = vadd.f32 0.0, %v942
    %v944 = vpop.f32.mrb[0].mxu0
    %945 = vdwg.mxu0
    %v946 = vsel %vm289, %v865, -inf
    %947 = vmax.xlane.f32.xlu0 %v946
    %v948 = vpop.xlane.xlu0 %947
    %v949 = vsel %vm289, %v943, -inf
    %950 = vmax.xlane.f32.xlu0 %v949
    %v951 = vpop.xlane.xlu0 %950
    %v952 = vsub.f32 %v865, %v948
    %v953 = vsub.f32 %v943, %v951
    %v954 = vmul.f32 %v952, 1.442695
    %v955 = vpow.pop %v954
    %v956 = vmul.f32 %v953, 1.442695
    %v957 = vpow.pop %v956
    %v958 = vsel %vm289, %v955, 0.0
    %959 = vadd.xlane.f32.xlu0 %v958
    %v960 = vpop.xlane.xlu0 %959
    %v961 = vsel %vm289, %v957, 0.0
    %962 = vadd.xlane.f32.xlu0 %v961
    %v963 = vpop.xlane.xlu0 %962
    %v964 = vrcp.pop %v960
    %v965 = vrcp.pop %v963
    %v966 = vmul.f32 %v955, %v964
    %v967 = vmul.f32 %v957, %v965
    %968 = vrot.lane.b32.xlu0 %v126, 96
    %v969 = vpop.permute.xlu0 %968
    %v972 = vsel %vm289, %v966, 0
    %974 = vmatprep.subr.mxu0 0.0
    %975 = vmatpush1.msra.mxu0 %v969
    %976 = vmatprep.subr.mxu0 0.0
    %977 = vmatpush1.msra.mxu0 0.0
    %978 = vmatprep.subr.mxu0 0.0
    %979 = vmatpush1.msra.mxu0 0.0
    %980 = vmatprep.subr.mxu0 0.0
    %981 = vmatpush1.msra.mxu0 0.0
    %982 = vmatprep.subr.mxu0 0.0
    %983 = vmatpush1.msra.mxu0 0.0
    %984 = vmatprep.subr.mxu0 0.0
    %985 = vmatpush1.msra.mxu0 0.0
    %986 = vmatprep.subr.mxu0 0.0
    %987 = vmatpush1.msra.mxu0 0.0
    %988 = vmatprep.subr.mxu0 0.0
    %989 = vmatpush1.msra.mxu0 0.0
    %990 = vmatprep.subr.mxu0 0.0
    %991 = vmatpush1.msra.mxu0 0.0
    %992 = vmatprep.subr.mxu0 0.0
    %993 = vmatpush1.msra.mxu0 0.0
    %994 = vmatprep.subr.mxu0 0.0
    %995 = vmatpush1.msra.mxu0 0.0
    %996 = vmatprep.subr.mxu0 0.0
    %997 = vmatpush1.msra.mxu0 0.0
    %998 = vmatprep.subr.mxu0 0.0
    %999 = vmatpush1.msra.mxu0 0.0
    %1000 = vmatprep.subr.mxu0 0.0
    %1001 = vmatpush1.msra.mxu0 0.0
    %1002 = vmatprep.subr.mxu0 0.0
    %1003 = vmatpush1.msra.mxu0 0.0
    %1004 = vmatprep.subr.mxu0 0.0
    %1005 = vmatpush1.msra.mxu0 0.0
    %1006 = vmatprep.subr.mxu0 0.0
    %1007 = vmatpush1.msra.mxu0 0.0
    %1008 = vmatprep.subr.mxu0 0.0
    %1009 = vmatpush1.msra.mxu0 0.0
    %1010 = vmatprep.subr.mxu0 0.0
    %1011 = vmatpush1.msra.mxu0 0.0
    %1012 = vmatprep.subr.mxu0 0.0
    %1013 = vmatpush1.msra.mxu0 0.0
    %1014 = vmatprep.subr.mxu0 0.0
    %1015 = vmatpush1.msra.mxu0 0.0
    %1016 = vmatprep.subr.mxu0 0.0
    %1017 = vmatpush1.msra.mxu0 0.0
    %1018 = vmatprep.subr.mxu0 0.0
    %1019 = vmatpush1.msra.mxu0 0.0
    %1020 = vmatprep.subr.mxu0 0.0
    %1021 = vmatpush1.msra.mxu0 0.0
    %1022 = vmatprep.subr.mxu0 0.0
    %1023 = vmatpush1.msra.mxu0 0.0
    %1024 = vmatprep.subr.mxu0 0.0
    %1025 = vmatpush1.msra.mxu0 0.0
    %1026 = vmatprep.subr.mxu0 0.0
    %1027 = vmatpush1.msra.mxu0 0.0
    %1028 = vmatprep.subr.mxu0 0.0
    %1029 = vmatpush1.msra.mxu0 0.0
    %1030 = vmatprep.subr.mxu0 0.0
    %1031 = vmatpush1.msra.mxu0 0.0
    %1032 = vmatprep.subr.mxu0 0.0
    %1033 = vmatpush1.msra.mxu0 0.0
    %1034 = vmatprep.subr.mxu0 0.0
    %1035 = vmatpush1.msra.mxu0 0.0
    %1036 = vmatprep.subr.mxu0 0.0
    %1037 = vmatpush1.msra.mxu0 0.0
    %1038 = vmatprep.mubr.f32.mxu0 0.0
    %1039 = vmatmul.mubr.f32.gmra.mrb[0].mxu0 %v972
    %v1040 = vpop.f32.mrb[0].mxu0
    %v1041 = vadd.f32 0.0, %v1040
    %v1042 = vpop.f32.mrb[0].mxu0
    %1043 = vdwg.mxu0
    %1044 = vrot.lane.b32.xlu0 %v132, 96
    %v1045 = vpop.permute.xlu0 %1044
    %v1048 = vsel %vm289, %v967, 0
    %1050 = vmatprep.subr.mxu0 0.0
    %1051 = vmatpush1.msra.mxu0 %v1045
    %1052 = vmatprep.subr.mxu0 0.0
    %1053 = vmatpush1.msra.mxu0 0.0
    %1054 = vmatprep.subr.mxu0 0.0
    %1055 = vmatpush1.msra.mxu0 0.0
    %1056 = vmatprep.subr.mxu0 0.0
    %1057 = vmatpush1.msra.mxu0 0.0
    %1058 = vmatprep.subr.mxu0 0.0
    %1059 = vmatpush1.msra.mxu0 0.0
    %1060 = vmatprep.subr.mxu0 0.0
    %1061 = vmatpush1.msra.mxu0 0.0
    %1062 = vmatprep.subr.mxu0 0.0
    %1063 = vmatpush1.msra.mxu0 0.0
    %1064 = vmatprep.subr.mxu0 0.0
    %1065 = vmatpush1.msra.mxu0 0.0
    %1066 = vmatprep.subr.mxu0 0.0
    %1067 = vmatpush1.msra.mxu0 0.0
    %1068 = vmatprep.subr.mxu0 0.0
    %1069 = vmatpush1.msra.mxu0 0.0
    %1070 = vmatprep.subr.mxu0 0.0
    %1071 = vmatpush1.msra.mxu0 0.0
    %1072 = vmatprep.subr.mxu0 0.0
    %1073 = vmatpush1.msra.mxu0 0.0
    %1074 = vmatprep.subr.mxu0 0.0
    %1075 = vmatpush1.msra.mxu0 0.0
    %1076 = vmatprep.subr.mxu0 0.0
    %1077 = vmatpush1.msra.mxu0 0.0
    %1078 = vmatprep.subr.mxu0 0.0
    %1079 = vmatpush1.msra.mxu0 0.0
    %1080 = vmatprep.subr.mxu0 0.0
    %1081 = vmatpush1.msra.mxu0 0.0
    %1082 = vmatprep.subr.mxu0 0.0
    %1083 = vmatpush1.msra.mxu0 0.0
    %1084 = vmatprep.subr.mxu0 0.0
    %1085 = vmatpush1.msra.mxu0 0.0
    %1086 = vmatprep.subr.mxu0 0.0
    %1087 = vmatpush1.msra.mxu0 0.0
    %1088 = vmatprep.subr.mxu0 0.0
    %1089 = vmatpush1.msra.mxu0 0.0
    %1090 = vmatprep.subr.mxu0 0.0
    %1091 = vmatpush1.msra.mxu0 0.0
    %1092 = vmatprep.subr.mxu0 0.0
    %1093 = vmatpush1.msra.mxu0 0.0
    %1094 = vmatprep.subr.mxu0 0.0
    %1095 = vmatpush1.msra.mxu0 0.0
    %1096 = vmatprep.subr.mxu0 0.0
    %1097 = vmatpush1.msra.mxu0 0.0
    %1098 = vmatprep.subr.mxu0 0.0
    %1099 = vmatpush1.msra.mxu0 0.0
    %1100 = vmatprep.subr.mxu0 0.0
    %1101 = vmatpush1.msra.mxu0 0.0
    %1102 = vmatprep.subr.mxu0 0.0
    %1103 = vmatpush1.msra.mxu0 0.0
    %1104 = vmatprep.subr.mxu0 0.0
    %1105 = vmatpush1.msra.mxu0 0.0
    %1106 = vmatprep.subr.mxu0 0.0
    %1107 = vmatpush1.msra.mxu0 0.0
    %1108 = vmatprep.subr.mxu0 0.0
    %1109 = vmatpush1.msra.mxu0 0.0
    %1110 = vmatprep.subr.mxu0 0.0
    %1111 = vmatpush1.msra.mxu0 0.0
    %1112 = vmatprep.subr.mxu0 0.0
    %1113 = vmatpush1.msra.mxu0 0.0
    %1114 = vmatprep.mubr.f32.mxu0 0.0
    %1115 = vmatmul.mubr.f32.gmra.mrb[0].mxu0 %v1048
    %v1116 = vpop.f32.mrb[0].mxu0
    %v1117 = vadd.f32 0.0, %v1116
    %v1118 = vpop.f32.mrb[0].mxu0
    %1119 = vdwg.mxu0
    %1120 = vrot.lane.b32.xlu0 %v124, 80
    %v1121 = vpop.permute.xlu0 %1120
    %1122 = vrot.lane.b32.xlu0 %v124, 16
    %v1123 = vpop.permute.xlu0 %1122
    %v1124 = vsel %vm137, %v1121, 0
    %v1126 = vsel %vm137, %v1123, 0
    %1128 = vmatprep.subr.mxu0 0.0
    %1129 = vmatpush1.xpose.msra.mxu0 %v1126
    %1130 = vmatprep.subr.mxu0 0.0
    %1131 = vmatpush1.xpose.msra.mxu0 0.0
    %1132 = vmatprep.subr.mxu0 0.0
    %1133 = vmatpush1.xpose.msra.mxu0 0.0
    %1134 = vmatprep.subr.mxu0 0.0
    %1135 = vmatpush1.xpose.msra.mxu0 0.0
    %1136 = vmatprep.subr.mxu0 0.0
    %1137 = vmatpush1.xpose.msra.mxu0 0.0
    %1138 = vmatprep.subr.mxu0 0.0
    %1139 = vmatpush1.xpose.msra.mxu0 0.0
    %1140 = vmatprep.subr.mxu0 0.0
    %1141 = vmatpush1.xpose.msra.mxu0 0.0
    %1142 = vmatprep.subr.mxu0 0.0
    %1143 = vmatpush1.xpose.msra.mxu0 0.0
    %1144 = vmatprep.subr.mxu0 0.0
    %1145 = vmatpush1.xpose.msra.mxu0 0.0
    %1146 = vmatprep.subr.mxu0 0.0
    %1147 = vmatpush1.xpose.msra.mxu0 0.0
    %1148 = vmatprep.subr.mxu0 0.0
    %1149 = vmatpush1.xpose.msra.mxu0 0.0
    %1150 = vmatprep.subr.mxu0 0.0
    %1151 = vmatpush1.xpose.msra.mxu0 0.0
    %1152 = vmatprep.subr.mxu0 0.0
    %1153 = vmatpush1.xpose.msra.mxu0 0.0
    %1154 = vmatprep.subr.mxu0 0.0
    %1155 = vmatpush1.xpose.msra.mxu0 0.0
    %1156 = vmatprep.subr.mxu0 0.0
    %1157 = vmatpush1.xpose.msra.mxu0 0.0
    %1158 = vmatprep.subr.mxu0 0.0
    %1159 = vmatpush1.xpose.msra.mxu0 0.0
    %1160 = vmatprep.subr.mxu0 0.0
    %1161 = vmatpush1.xpose.msra.mxu0 0.0
    %1162 = vmatprep.subr.mxu0 0.0
    %1163 = vmatpush1.xpose.msra.mxu0 0.0
    %1164 = vmatprep.subr.mxu0 0.0
    %1165 = vmatpush1.xpose.msra.mxu0 0.0
    %1166 = vmatprep.subr.mxu0 0.0
    %1167 = vmatpush1.xpose.msra.mxu0 0.0
    %1168 = vmatprep.subr.mxu0 0.0
    %1169 = vmatpush1.xpose.msra.mxu0 0.0
    %1170 = vmatprep.subr.mxu0 0.0
    %1171 = vmatpush1.xpose.msra.mxu0 0.0
    %1172 = vmatprep.subr.mxu0 0.0
    %1173 = vmatpush1.xpose.msra.mxu0 0.0
    %1174 = vmatprep.subr.mxu0 0.0
    %1175 = vmatpush1.xpose.msra.mxu0 0.0
    %1176 = vmatprep.subr.mxu0 0.0
    %1177 = vmatpush1.xpose.msra.mxu0 0.0
    %1178 = vmatprep.subr.mxu0 0.0
    %1179 = vmatpush1.xpose.msra.mxu0 0.0
    %1180 = vmatprep.subr.mxu0 0.0
    %1181 = vmatpush1.xpose.msra.mxu0 0.0
    %1182 = vmatprep.subr.mxu0 0.0
    %1183 = vmatpush1.xpose.msra.mxu0 0.0
    %1184 = vmatprep.subr.mxu0 0.0
    %1185 = vmatpush1.xpose.msra.mxu0 0.0
    %1186 = vmatprep.subr.mxu0 0.0
    %1187 = vmatpush1.xpose.msra.mxu0 0.0
    %1188 = vmatprep.subr.mxu0 0.0
    %1189 = vmatpush1.xpose.msra.mxu0 0.0
    %1190 = vmatprep.subr.mxu0 0.0
    %1191 = vmatpush1.xpose.msra.mxu0 0.0
    %1192 = vmatprep.mubr.f32.mxu0 0.0
    %1193 = vmatmul.mubr.f32.gmra.mrb[0].mxu0 %v1124
    %v1194 = vpop.f32.mrb[0].mxu0
    %v1195 = vadd.f32 0.0, %v1194
    %v1196 = vpop.f32.mrb[0].mxu0
    %1197 = vdwg.mxu0
    %1198 = vrot.lane.b32.xlu0 %v130, 80
    %v1199 = vpop.permute.xlu0 %1198
    %1200 = vrot.lane.b32.xlu0 %v130, 16
    %v1201 = vpop.permute.xlu0 %1200
    %v1202 = vsel %vm137, %v1199, 0
    %v1204 = vsel %vm137, %v1201, 0
    %1206 = vmatprep.subr.mxu0 0.0
    %1207 = vmatpush1.xpose.msra.mxu0 %v1204
    %1208 = vmatprep.subr.mxu0 0.0
    %1209 = vmatpush1.xpose.msra.mxu0 0.0
    %1210 = vmatprep.subr.mxu0 0.0
    %1211 = vmatpush1.xpose.msra.mxu0 0.0
    %1212 = vmatprep.subr.mxu0 0.0
    %1213 = vmatpush1.xpose.msra.mxu0 0.0
    %1214 = vmatprep.subr.mxu0 0.0
    %1215 = vmatpush1.xpose.msra.mxu0 0.0
    %1216 = vmatprep.subr.mxu0 0.0
    %1217 = vmatpush1.xpose.msra.mxu0 0.0
    %1218 = vmatprep.subr.mxu0 0.0
    %1219 = vmatpush1.xpose.msra.mxu0 0.0
    %1220 = vmatprep.subr.mxu0 0.0
    %1221 = vmatpush1.xpose.msra.mxu0 0.0
    %1222 = vmatprep.subr.mxu0 0.0
    %1223 = vmatpush1.xpose.msra.mxu0 0.0
    %1224 = vmatprep.subr.mxu0 0.0
    %1225 = vmatpush1.xpose.msra.mxu0 0.0
    %1226 = vmatprep.subr.mxu0 0.0
    %1227 = vmatpush1.xpose.msra.mxu0 0.0
    %1228 = vmatprep.subr.mxu0 0.0
    %1229 = vmatpush1.xpose.msra.mxu0 0.0
    %1230 = vmatprep.subr.mxu0 0.0
    %1231 = vmatpush1.xpose.msra.mxu0 0.0
    %1232 = vmatprep.subr.mxu0 0.0
    %1233 = vmatpush1.xpose.msra.mxu0 0.0
    %1234 = vmatprep.subr.mxu0 0.0
    %1235 = vmatpush1.xpose.msra.mxu0 0.0
    %1236 = vmatprep.subr.mxu0 0.0
    %1237 = vmatpush1.xpose.msra.mxu0 0.0
    %1238 = vmatprep.subr.mxu0 0.0
    %1239 = vmatpush1.xpose.msra.mxu0 0.0
    %1240 = vmatprep.subr.mxu0 0.0
    %1241 = vmatpush1.xpose.msra.mxu0 0.0
    %1242 = vmatprep.subr.mxu0 0.0
    %1243 = vmatpush1.xpose.msra.mxu0 0.0
    %1244 = vmatprep.subr.mxu0 0.0
    %1245 = vmatpush1.xpose.msra.mxu0 0.0
    %1246 = vmatprep.subr.mxu0 0.0
    %1247 = vmatpush1.xpose.msra.mxu0 0.0
    %1248 = vmatprep.subr.mxu0 0.0
    %1249 = vmatpush1.xpose.msra.mxu0 0.0
    %1250 = vmatprep.subr.mxu0 0.0
    %1251 = vmatpush1.xpose.msra.mxu0 0.0
    %1252 = vmatprep.subr.mxu0 0.0
    %1253 = vmatpush1.xpose.msra.mxu0 0.0
    %1254 = vmatprep.subr.mxu0 0.0
    %1255 = vmatpush1.xpose.msra.mxu0 0.0
    %1256 = vmatprep.subr.mxu0 0.0
    %1257 = vmatpush1.xpose.msra.mxu0 0.0
    %1258 = vmatprep.subr.mxu0 0.0
    %1259 = vmatpush1.xpose.msra.mxu0 0.0
    %1260 = vmatprep.subr.mxu0 0.0
    %1261 = vmatpush1.xpose.msra.mxu0 0.0
    %1262 = vmatprep.subr.mxu0 0.0
    %1263 = vmatpush1.xpose.msra.mxu0 0.0
    %1264 = vmatprep.subr.mxu0 0.0
    %1265 = vmatpush1.xpose.msra.mxu0 0.0
    %1266 = vmatprep.subr.mxu0 0.0
    %1267 = vmatpush1.xpose.msra.mxu0 0.0
    %1268 = vmatprep.subr.mxu0 0.0
    %1269 = vmatpush1.xpose.msra.mxu0 0.0
    %1270 = vmatprep.mubr.f32.mxu0 0.0
    %1271 = vmatmul.mubr.f32.gmra.mrb[0].mxu0 %v1202
    %v1272 = vpop.f32.mrb[0].mxu0
    %v1273 = vadd.f32 0.0, %v1272
    %v1274 = vpop.f32.mrb[0].mxu0
    %1275 = vdwg.mxu0
    %v1276 = vsel %vm289, %v1195, -inf
    %1277 = vmax.xlane.f32.xlu0 %v1276
    %v1278 = vpop.xlane.xlu0 %1277
    %v1279 = vsel %vm289, %v1273, -inf
    %1280 = vmax.xlane.f32.xlu0 %v1279
    %v1281 = vpop.xlane.xlu0 %1280
    %v1282 = vsub.f32 %v1195, %v1278
    %v1283 = vsub.f32 %v1273, %v1281
    %v1284 = vmul.f32 %v1282, 1.442695
    %v1285 = vpow.pop %v1284
    %v1286 = vmul.f32 %v1283, 1.442695
    %v1287 = vpow.pop %v1286
    %v1288 = vsel %vm289, %v1285, 0.0
    %1289 = vadd.xlane.f32.xlu0 %v1288
    %v1290 = vpop.xlane.xlu0 %1289
    %v1291 = vsel %vm289, %v1287, 0.0
    %1292 = vadd.xlane.f32.xlu0 %v1291
    %v1293 = vpop.xlane.xlu0 %1292
    %v1294 = vrcp.pop %v1290
    %v1295 = vrcp.pop %v1293
    %v1296 = vmul.f32 %v1285, %v1294
    %v1297 = vmul.f32 %v1287, %v1295
    %1298 = vrot.lane.b32.xlu0 %v126, 80
    %v1299 = vpop.permute.xlu0 %1298
    %v1302 = vsel %vm289, %v1296, 0
    %1304 = vmatprep.subr.mxu0 0.0
    %1305 = vmatpush1.msra.mxu0 %v1299
    %1306 = vmatprep.subr.mxu0 0.0
    %1307 = vmatpush1.msra.mxu0 0.0
    %1308 = vmatprep.subr.mxu0 0.0
    %1309 = vmatpush1.msra.mxu0 0.0
    %1310 = vmatprep.subr.mxu0 0.0
    %1311 = vmatpush1.msra.mxu0 0.0
    %1312 = vmatprep.subr.mxu0 0.0
    %1313 = vmatpush1.msra.mxu0 0.0
    %1314 = vmatprep.subr.mxu0 0.0
    %1315 = vmatpush1.msra.mxu0 0.0
    %1316 = vmatprep.subr.mxu0 0.0
    %1317 = vmatpush1.msra.mxu0 0.0
    %1318 = vmatprep.subr.mxu0 0.0
    %1319 = vmatpush1.msra.mxu0 0.0
    %1320 = vmatprep.subr.mxu0 0.0
    %1321 = vmatpush1.msra.mxu0 0.0
    %1322 = vmatprep.subr.mxu0 0.0
    %1323 = vmatpush1.msra.mxu0 0.0
    %1324 = vmatprep.subr.mxu0 0.0
    %1325 = vmatpush1.msra.mxu0 0.0
    %1326 = vmatprep.subr.mxu0 0.0
    %1327 = vmatpush1.msra.mxu0 0.0
    %1328 = vmatprep.subr.mxu0 0.0
    %1329 = vmatpush1.msra.mxu0 0.0
    %1330 = vmatprep.subr.mxu0 0.0
    %1331 = vmatpush1.msra.mxu0 0.0
    %1332 = vmatprep.subr.mxu0 0.0
    %1333 = vmatpush1.msra.mxu0 0.0
    %1334 = vmatprep.subr.mxu0 0.0
    %1335 = vmatpush1.msra.mxu0 0.0
    %1336 = vmatprep.subr.mxu0 0.0
    %1337 = vmatpush1.msra.mxu0 0.0
    %1338 = vmatprep.subr.mxu0 0.0
    %1339 = vmatpush1.msra.mxu0 0.0
    %1340 = vmatprep.subr.mxu0 0.0
    %1341 = vmatpush1.msra.mxu0 0.0
    %1342 = vmatprep.subr.mxu0 0.0
    %1343 = vmatpush1.msra.mxu0 0.0
    %1344 = vmatprep.subr.mxu0 0.0
    %1345 = vmatpush1.msra.mxu0 0.0
    %1346 = vmatprep.subr.mxu0 0.0
    %1347 = vmatpush1.msra.mxu0 0.0
    %1348 = vmatprep.subr.mxu0 0.0
    %1349 = vmatpush1.msra.mxu0 0.0
    %1350 = vmatprep.subr.mxu0 0.0
    %1351 = vmatpush1.msra.mxu0 0.0
    %1352 = vmatprep.subr.mxu0 0.0
    %1353 = vmatpush1.msra.mxu0 0.0
    %1354 = vmatprep.subr.mxu0 0.0
    %1355 = vmatpush1.msra.mxu0 0.0
    %1356 = vmatprep.subr.mxu0 0.0
    %1357 = vmatpush1.msra.mxu0 0.0
    %1358 = vmatprep.subr.mxu0 0.0
    %1359 = vmatpush1.msra.mxu0 0.0
    %1360 = vmatprep.subr.mxu0 0.0
    %1361 = vmatpush1.msra.mxu0 0.0
    %1362 = vmatprep.subr.mxu0 0.0
    %1363 = vmatpush1.msra.mxu0 0.0
    %1364 = vmatprep.subr.mxu0 0.0
    %1365 = vmatpush1.msra.mxu0 0.0
    %1366 = vmatprep.subr.mxu0 0.0
    %1367 = vmatpush1.msra.mxu0 0.0
    %1368 = vmatprep.mubr.f32.mxu0 0.0
    %1369 = vmatmul.mubr.f32.gmra.mrb[0].mxu0 %v1302
    %v1370 = vpop.f32.mrb[0].mxu0
    %v1371 = vadd.f32 0.0, %v1370
    %v1372 = vpop.f32.mrb[0].mxu0
    %1373 = vdwg.mxu0
    %1374 = vrot.lane.b32.xlu0 %v132, 80
    %v1375 = vpop.permute.xlu0 %1374
    %v1378 = vsel %vm289, %v1297, 0
    %1380 = vmatprep.subr.mxu0 0.0
    %1381 = vmatpush1.msra.mxu0 %v1375
    %1382 = vmatprep.subr.mxu0 0.0
    %1383 = vmatpush1.msra.mxu0 0.0
    %1384 = vmatprep.subr.mxu0 0.0
    %1385 = vmatpush1.msra.mxu0 0.0
    %1386 = vmatprep.subr.mxu0 0.0
    %1387 = vmatpush1.msra.mxu0 0.0
    %1388 = vmatprep.subr.mxu0 0.0
    %1389 = vmatpush1.msra.mxu0 0.0
    %1390 = vmatprep.subr.mxu0 0.0
    %1391 = vmatpush1.msra.mxu0 0.0
    %1392 = vmatprep.subr.mxu0 0.0
    %1393 = vmatpush1.msra.mxu0 0.0
    %1394 = vmatprep.subr.mxu0 0.0
    %1395 = vmatpush1.msra.mxu0 0.0
    %1396 = vmatprep.subr.mxu0 0.0
    %1397 = vmatpush1.msra.mxu0 0.0
    %1398 = vmatprep.subr.mxu0 0.0
    %1399 = vmatpush1.msra.mxu0 0.0
    %1400 = vmatprep.subr.mxu0 0.0
    %1401 = vmatpush1.msra.mxu0 0.0
    %1402 = vmatprep.subr.mxu0 0.0
    %1403 = vmatpush1.msra.mxu0 0.0
    %1404 = vmatprep.subr.mxu0 0.0
    %1405 = vmatpush1.msra.mxu0 0.0
    %1406 = vmatprep.subr.mxu0 0.0
    %1407 = vmatpush1.msra.mxu0 0.0
    %1408 = vmatprep.subr.mxu0 0.0
    %1409 = vmatpush1.msra.mxu0 0.0
    %1410 = vmatprep.subr.mxu0 0.0
    %1411 = vmatpush1.msra.mxu0 0.0
    %1412 = vmatprep.subr.mxu0 0.0
    %1413 = vmatpush1.msra.mxu0 0.0
    %1414 = vmatprep.subr.mxu0 0.0
    %1415 = vmatpush1.msra.mxu0 0.0
    %1416 = vmatprep.subr.mxu0 0.0
    %1417 = vmatpush1.msra.mxu0 0.0
    %1418 = vmatprep.subr.mxu0 0.0
    %1419 = vmatpush1.msra.mxu0 0.0
    %1420 = vmatprep.subr.mxu0 0.0
    %1421 = vmatpush1.msra.mxu0 0.0
    %1422 = vmatprep.subr.mxu0 0.0
    %1423 = vmatpush1.msra.mxu0 0.0
    %1424 = vmatprep.subr.mxu0 0.0
    %1425 = vmatpush1.msra.mxu0 0.0
    %1426 = vmatprep.subr.mxu0 0.0
    %1427 = vmatpush1.msra.mxu0 0.0
    %1428 = vmatprep.subr.mxu0 0.0
    %1429 = vmatpush1.msra.mxu0 0.0
    %1430 = vmatprep.subr.mxu0 0.0
    %1431 = vmatpush1.msra.mxu0 0.0
    %1432 = vmatprep.subr.mxu0 0.0
    %1433 = vmatpush1.msra.mxu0 0.0
    %1434 = vmatprep.subr.mxu0 0.0
    %1435 = vmatpush1.msra.mxu0 0.0
    %1436 = vmatprep.subr.mxu0 0.0
    %1437 = vmatpush1.msra.mxu0 0.0
    %1438 = vmatprep.subr.mxu0 0.0
    %1439 = vmatpush1.msra.mxu0 0.0
    %1440 = vmatprep.subr.mxu0 0.0
    %1441 = vmatpush1.msra.mxu0 0.0
    %1442 = vmatprep.subr.mxu0 0.0
    %1443 = vmatpush1.msra.mxu0 0.0
    %1444 = vmatprep.mubr.f32.mxu0 0.0
    %1445 = vmatmul.mubr.f32.gmra.mrb[0].mxu0 %v1378
    %v1446 = vpop.f32.mrb[0].mxu0
    %v1447 = vadd.f32 0.0, %v1446
    %v1448 = vpop.f32.mrb[0].mxu0
    %1449 = vdwg.mxu0
    %1452 = vrot.lane.b32.xlu0 %v710, 16
    %v1453 = vpop.permute.xlu0 %1452
    %1454 = vrot.lane.b32.xlu0 %v787, 16
    %v1455 = vpop.permute.xlu0 %1454
    %1460 = vrot.lane.b32.xlu0 %v1041, 32
    %v1461 = vpop.permute.xlu0 %1460
    %1462 = vrot.lane.b32.xlu0 %v1117, 32
    %v1463 = vpop.permute.xlu0 %1462
    %1468 = vrot.lane.b32.xlu0 %v1371, 48
    %v1469 = vpop.permute.xlu0 %1468
    %1470 = vrot.lane.b32.xlu0 %v1447, 48
    %v1471 = vpop.permute.xlu0 %1470
    %v1474 = vsel %vm137, %v382, %v1453
    %v1475 = vsel %vm137, %v455, %v1455
    %v1476 = vsel %vm50, %v1474, %v1461
    %v1477 = vsel %vm50, %v1475, %v1463
    %vm1478 = vcmask 392192
    %v1479 = vsel %vm1478, %v1476, %v1469
    %v1480 = vsel %vm1478, %v1477, %v1471
    %vm1481 = vcmask 523264
    %1482 = vst.msk [vmem:[#allocation7] sm:$0xff] %vm1481, %v1479
    %1483 = vst.msk [vmem:[#allocation7 + $0x8] sm:$0xff] %vm1481, %v1480
    // Predicated region
    $region18: #{tpu_custom_call.1} parent=1 // pred_check
      _
    $region19: #{tpu_custom_call.1} parent=1 // pred_check_branch
      %1485 = sbr.rel (0) target = $region21
    $region20: #{tpu_custom_call.1} parent=1 // pred_region
      %s1487 = ssub.s32 256, 256
      %1488 = vsyncadd [#allocation4], %s1487
      %s1489 = sshll.u32 [#allocation7], 4
      %s1490 = int_to_ptr.vmem [resolvable:$true] %s1489
      %1495 = dma.vmem_to_hbm [thread:$0]  %s1490, 256, %s2, [#allocation4], 128, 128, 8
    $region21: #{tpu_custom_call.1} parent=1 // pred_fallthru
      _
    // Predicated region
    $region22: #{tpu_custom_call.1} parent=1 // pred_check
      _
    $region23: #{tpu_custom_call.1} parent=1 // pred_check_branch
      %1497 = sbr.rel (0) target = $region25
    $region24: #{tpu_custom_call.1} parent=1 // pred_region
      %1498 = dma.done [#allocation4], 256
    $region25: #{tpu_custom_call.1} parent=1 // pred_fallthru
      _
    %1499 = vsyncpa [#allocation3], 1
    %1500 = vsyncpa [#allocation6], 1
    %1501 = vsyncpa [#allocation4], 1

</llo_original>
